<compile_context>
chip_gen: v6e
topology: v6e:2x2x1
jax: 0.10.0
libtpu: 0.0.40
codegen_flags: <defaults>
</compile_context>

<pallas_src>
import functools
import math

import numpy as np
import jax
import jax.numpy as jnp
from jax import lax
from jax.experimental import pallas as pl
from jax.experimental.pallas import tpu as pltpu


# ----------------------------------------------------------------------------
# Pallas kernel: one (batch, query-tile) step of fused cross-attention.
#   x_ref  : (1, tq, C)  query tokens (bf16)
#   r_ref  : (1, M,  C)  (possibly spatially-reduced + normed) reference tokens (bf16)
#   wq_ref : (C, C)      Q projection weight, softmax scale pre-folded (bf16)
#   wkv_ref: (C, 2C)     fused K|V projection weight (bf16)
#   wp_ref : (C, C)      output projection weight (bf16)
#   bp_ref : (1, C)      output projection bias (f32)
#   o_ref  : (1, tq, C)  output tokens (bf16)
#   kh_ref : (H, M, d)   scratch: head-major K cache (bf16), valid for current batch
#   vh_ref : (H, M, d)   scratch: head-major V cache (bf16), valid for current batch
# ----------------------------------------------------------------------------
def _attn_kernel(x_ref, r_ref, wq_ref, wkv_ref, wp_ref, bp_ref, o_ref,
                 kh_ref, vh_ref, *, num_heads):
    C = x_ref.shape[-1]
    d = C // num_heads

    # ---- K/V projection + head split: once per batch element (qt == 0), cached ----
    @pl.when(pl.program_id(1) == 0)
    def _():
        r = r_ref[0]                                                    # (M, C) bf16
        kv = jnp.dot(r, wkv_ref[...],
                     preferred_element_type=jnp.float32)                # (M, 2C) f32
        kvb = kv.astype(jnp.bfloat16)
        for h in range(num_heads):                                      # static lane slices
            kh_ref[h] = kvb[:, h * d:(h + 1) * d]
            vh_ref[h] = kvb[:, C + h * d:C + (h + 1) * d]

    # ---- Per-query-tile work ----
    x = x_ref[0]                                                        # (tq, C) bf16
    q = jnp.dot(x, wq_ref[...], preferred_element_type=jnp.float32)     # scale folded
    qb = q.astype(jnp.bfloat16)
    # TODO(synk): replace the static-slice+stack head split / lane-concat merge with a
    #             single layout-aware pltpu.einshape once the dim-splitting grammar is
    #             verified; per-tile cost is now only the Q split and output merge.
    qh = jnp.stack([qb[:, h * d:(h + 1) * d] for h in range(num_heads)],
                   axis=0)                                              # (H, tq, d)

    # Head-batched scores; numerically stable, UNNORMALISED softmax in f32.
    s = jnp.einsum("hqd,hkd->hqk", qh, kh_ref[...],
                   preferred_element_type=jnp.float32)                  # (H, tq, M)
    s = s - jnp.max(s, axis=-1, keepdims=True)
    # TODO(synk): cast s to bf16 before exp on v6e/v7x (bf16 EUP) once generation
    #             detection is plumbed; keep f32 exp on v5e.
    p = jnp.exp(s)
    l = jnp.sum(p, axis=-1, keepdims=True)                              # (H, tq, 1)

    # P@V, then deferred normalisation on the narrow output.
    oh = jnp.einsum("hqk,hkd->hqd", p.astype(jnp.bfloat16), vh_ref[...],
                    preferred_element_type=jnp.float32)                  # (H, tq, d)
    oh = oh * pl.reciprocal(l, approx=True)

    # Merge heads along lanes once, then a single full-width output projection.
    o = jnp.concatenate([oh[h] for h in range(num_heads)], axis=-1).astype(jnp.bfloat16)
    out = jnp.dot(o, wp_ref[...], preferred_element_type=jnp.float32) + bp_ref[...]
    o_ref[0] = out.astype(o_ref.dtype)
    # TODO(synk): add an M-axis online-softmax loop (running max/sum + acc scratch) so
    #             the f32 (H,tq,M) score buffer and the K/V cache stream in tiles for
    #             production-size M (needed to stay inside v7x's 64 MiB VMEM).
    # TODO(synk): pack multiple heads per MXU pass when head_dim <= 64 (block-diagonal
    #             RHS) to lift MXU utilisation on the 256-wide v6e/v7x MXUs.


# ----------------------------------------------------------------------------
# Per-generation VMEM model -> block_q / vmem_limit_bytes
# ----------------------------------------------------------------------------
def _vmem_capacity_bytes():
    try:
        return int(pltpu.get_tpu_info().vmem_capacity_bytes)
    except Exception:
        return 128 * 1024 * 1024   # v5e/v6e default


def _vmem_estimate(block_q, M, C, num_heads):
    """Rough per-step VMEM footprint (bytes) of the fused kernel."""
    weights = 2 * (4 * C * C) * 2              # wq + wkv(2C^2) + wp, bf16, double-buffered
    r_blk = 2 * M * C * 2                      # reference block, bf16, double-buffered
    kv_scr = 2 * M * C * 2                     # kh + vh head-major scratch, bf16
    kv_tmp = M * 2 * C * 4                     # one-shot f32 K|V projection temp
    io_blk = 2 * 2 * block_q * C * 2           # x + o blocks, bf16, double-buffered
    scores = 3 * num_heads * block_q * M * 4   # s, p (+ headroom), f32
    vecs = 4 * block_q * C * 4                 # q / qh / oh / out f32 temps
    return weights + r_blk + kv_scr + kv_tmp + io_blk + scores + vecs


def _pick_block_q(N, M, C, num_heads, budget):
    # MXU-friendly candidates (multiples of 256/128 preferred), minimum 16 (bf16 sublanes).
    for c in (1024, 512, 256, 128, 64, 32, 16):
        if N % c == 0 and _vmem_estimate(c, M, C, num_heads) <= budget:
            return c
    for c in (16, 32, 64, 128, 256, 512, 1024):
        if N % c == 0:
            return c
    return N


# ----------------------------------------------------------------------------
# Wrapper: fused attention pallas_call
# ----------------------------------------------------------------------------
def _fused_attention(x, ref_kv, wq, wk, wv, wp, bp, *, num_heads, scale):
    B, N, C = x.shape
    M = ref_kv.shape[1]
    d = C // num_heads

    cap = _vmem_capacity_bytes()
    budget = min(int(0.75 * cap), 100 * 1024 * 1024)   # ~48 MiB on v7x, ~96 MiB on v5e/v6e
    block_q = _pick_block_q(N, M, C, num_heads, budget)
    if N % block_q != 0:
        block_q = N
    n_qt = N // block_q

    # Fold softmax scale into Q weight; fuse K/V weights; bf16 operands for the MXU.
    wq_s = (wq * scale).astype(jnp.bfloat16)
    wkv = jnp.concatenate([wk, wv], axis=1).astype(jnp.bfloat16)        # (C, 2C)
    wp_b = wp.astype(jnp.bfloat16)

    kernel = functools.partial(_attn_kernel, num_heads=num_heads)
    return pl.pallas_call(
        kernel,
        out_shape=jax.ShapeDtypeStruct((B, N, C), jnp.bfloat16),
        grid_spec=pltpu.PrefetchScalarGridSpec(
            num_scalar_prefetch=0,
            grid=(B, n_qt),
            in_specs=[
                pl.BlockSpec((1, block_q, C), lambda b, qt: (b, qt, 0)),
                pl.BlockSpec((1, M, C), lambda b, qt: (b, 0, 0)),
                pl.BlockSpec((C, C), lambda b, qt: (0, 0)),
                pl.BlockSpec((C, 2 * C), lambda b, qt: (0, 0)),
                pl.BlockSpec((C, C), lambda b, qt: (0, 0)),
                pl.BlockSpec((1, C), lambda b, qt: (0, 0)),
            ],
            out_specs=pl.BlockSpec((1, block_q, C), lambda b, qt: (b, qt, 0)),
            scratch_shapes=[
                pltpu.VMEM((num_heads, M, d), jnp.bfloat16),   # head-major K cache
                pltpu.VMEM((num_heads, M, d), jnp.bfloat16),   # head-major V cache
            ],
        ),
        compiler_params=pltpu.CompilerParams(
            # qt innermost + "arbitrary": the per-batch K/V scratch cache stays valid
            # per core; batch is "parallel" for megacore sharding.
            dimension_semantics=("parallel", "arbitrary"),
            vmem_limit_bytes=int(budget),
        ),
    )(x.astype(jnp.bfloat16), ref_kv.astype(jnp.bfloat16),
      wq_s, wkv, wp_b, bp.astype(jnp.float32))


# ----------------------------------------------------------------------------
# Parameter construction (deterministic, mirrors Attention_Ref.__init__ shapes)
# ----------------------------------------------------------------------------
def init_params(key, dim, num_heads, sr_ratio):
    ks = jax.random.split(key, 6)
    p = {}
    # nn.Linear(dim, dim, bias=False): stored transposed for x @ W form.
    p["wq"] = 0.02 * jax.random.normal(ks[0], (dim, dim), jnp.float32)
    # nn.Linear(dim, 2*dim, bias=False): weight (2*dim, dim) -> split rows into K / V.
    wkv = 0.02 * jax.random.normal(ks[1], (2 * dim, dim), jnp.float32)
    p["wk"] = wkv[:dim].T        # (dim, dim)
    p["wv"] = wkv[dim:].T        # (dim, dim)
    # nn.Linear(dim, dim) with bias (bias init = 0 per _init_weights).
    p["wp"] = (0.02 * jax.random.normal(ks[2], (dim, dim), jnp.float32)).T
    p["bp"] = jnp.zeros((1, dim), jnp.float32)
    if sr_ratio > 1:
        fan_out = sr_ratio * sr_ratio * dim
        p["sr_w"] = math.sqrt(2.0 / fan_out) * jax.random.normal(
            ks[3], (dim, dim, sr_ratio, sr_ratio), jnp.float32)  # OIHW
        p["sr_b"] = jnp.zeros((dim,), jnp.float32)
        p["ln_w"] = jnp.ones((dim,), jnp.float32)
        p["ln_b"] = jnp.zeros((dim,), jnp.float32)
    return p


def _spatial_reduce(ref, H, W, params, sr_ratio):
    """PyTorch: ref.permute(0,2,1).reshape(B,C,H,W) -> Conv2d(k=s,stride=s) -> LayerNorm."""
    # TODO(synk): strided Conv2d + LayerNorm kept as XLA glue (no clean Pallas win here).
    B, N, C = ref.shape
    ref_img = jnp.transpose(ref, (0, 2, 1)).reshape(B, C, H, W)         # NCHW
    ref_sr = lax.conv_general_dilated(
        ref_img, params["sr_w"], window_strides=(sr_ratio, sr_ratio),
        padding="VALID", dimension_numbers=("NCHW", "OIHW", "NCHW"))
    ref_sr = ref_sr + params["sr_b"][None, :, None, None]
    ref_sr = ref_sr.reshape(B, C, -1).transpose(0, 2, 1)                # (B, M, C)
    mu = ref_sr.mean(-1, keepdims=True)
    var = ref_sr.var(-1, keepdims=True)                                 # biased, like torch LN
    ref_sr = (ref_sr - mu) / jnp.sqrt(var + 1e-5)
    return ref_sr * params["ln_w"] + params["ln_b"]


def attention_ref_forward(x, H, W, ref, params, *, num_heads, sr_ratio):
    """Pallas-backed forward matching Attention_Ref.forward (eval mode: dropout = id)."""
    dim = x.shape[-1]
    head_dim = dim // num_heads
    scale = head_dim ** (-0.5)
    ref_kv = _spatial_reduce(ref, H, W, params, sr_ratio) if sr_ratio > 1 else ref
    return _fused_attention(x, ref_kv, params["wq"], params["wk"], params["wv"],
                            params["wp"], params["bp"],
                            num_heads=num_heads, scale=scale)


# ----------------------------------------------------------------------------
# Pure-JAX f32 reference (mirrors the PyTorch graph op-for-op) for validation.
# ----------------------------------------------------------------------------
def attention_ref_reference(x, H, W, ref, params, *, num_heads, sr_ratio):
    B, N, C = x.shape
    d = C // num_heads
    scale = d ** (-0.5)
    q = (x @ params["wq"]).reshape(B, N, num_heads, d).transpose(0, 2, 1, 3)
    ref_kv = _spatial_reduce(ref, H, W, params, sr_ratio) if sr_ratio > 1 else ref
    M = ref_kv.shape[1]
    k = (ref_kv @ params["wk"]).reshape(B, M, num_heads, d).transpose(0, 2, 1, 3)
    v = (ref_kv @ params["wv"]).reshape(B, M, num_heads, d).transpose(0, 2, 1, 3)
    attn = (q @ jnp.swapaxes(k, -2, -1)) * scale
    attn = jax.nn.softmax(attn, axis=-1)
    out = (attn @ v).transpose(0, 2, 1, 3).reshape(B, N, C)
    return out @ params["wp"] + params["bp"]


if __name__ == "__main__":
    key = jax.random.PRNGKey(0)
    B, H, W, C, num_heads = 2, 8, 8, 32, 4
    N = H * W

    kx, kr, kp1, kp2 = jax.random.split(key, 4)
    x = jax.random.normal(kx, (B, N, C), jnp.float32)
    ref = jax.random.normal(kr, (B, N, C), jnp.float32)

    ok = True
    for sr_ratio, pkey in ((1, kp1), (2, kp2)):
        params = init_params(pkey, C, num_heads, sr_ratio)
        out = attention_ref_forward(x, H, W, ref, params,
                                    num_heads=num_heads, sr_ratio=sr_ratio)
        out = jax.block_until_ready(out)
        expected = attention_ref_reference(x, H, W, ref, params,
                                           num_heads=num_heads, sr_ratio=sr_ratio)
        # bf16 matmul operands + bf16 output -> loosened tolerance (f32 accumulation).
        out_f32 = np.asarray(out).astype(np.float32)
        exp_f32 = np.asarray(expected)
        if not np.allclose(out_f32, exp_f32, atol=2e-2, rtol=2e-2):
            ok = False
            print(f"MISMATCH sr_ratio={sr_ratio}: "
                  f"max err {np.max(np.abs(out_f32 - exp_f32))}")

    if ok:
        print("KERNEL_OK")
</pallas_src>

<mosaic_0001>
module attributes {stable_mosaic.version = 11 : i64} {
  func.func @_attn_kernel(%arg0: i32, %arg1: i32, %arg2: memref<1x64x32xbf16, #tpu.memory_space<vmem>>, %arg3: memref<1x64x32xbf16, #tpu.memory_space<vmem>>, %arg4: memref<32x32xbf16, #tpu.memory_space<vmem>>, %arg5: memref<32x64xbf16, #tpu.memory_space<vmem>>, %arg6: memref<32x32xbf16, #tpu.memory_space<vmem>>, %arg7: memref<1x32xf32, #tpu.memory_space<vmem>>, %arg8: memref<1x64x32xbf16, #tpu.memory_space<vmem>>, %arg9: memref<4x64x8xbf16, #tpu.memory_space<vmem>>, %arg10: memref<4x64x8xbf16, #tpu.memory_space<vmem>>) attributes {dimension_semantics = [#tpu.dimension_semantics<parallel>, #tpu.dimension_semantics<arbitrary>], iteration_bounds = array<i64: 2, 1>, scalar_prefetch = 0 : i64, scratch_operands = 2 : i64, tpu.core_type = #tpu.core_type<tc>, window_params = [{transform_indices = @transform_0, window_bounds = array<i64: 1, 64, 32>}, {transform_indices = @transform_1, window_bounds = array<i64: 1, 64, 32>}, {pipeline_mode = #tpu.pipeline_mode<synchronous>, transform_indices = @transform_2, window_bounds = array<i64: 32, 32>}, {pipeline_mode = #tpu.pipeline_mode<synchronous>, transform_indices = @transform_3, window_bounds = array<i64: 32, 64>}, {pipeline_mode = #tpu.pipeline_mode<synchronous>, transform_indices = @transform_4, window_bounds = array<i64: 32, 32>}, {pipeline_mode = #tpu.pipeline_mode<synchronous>, transform_indices = @transform_5, window_bounds = array<i64: 1, 32>}, {transform_indices = @transform_6, window_bounds = array<i64: 1, 64, 32>}]} {
    %c0_i32 = arith.constant 0 : i32
    %0 = arith.cmpi eq, %arg1, %c0_i32 : i32
    %1 = arith.extui %0 : i1 to i32
    %c0_i32_0 = arith.constant 0 : i32
    %2 = arith.cmpi ne, %1, %c0_i32_0 : i32
    scf.if %2 {
      %c0_23 = arith.constant 0 : index
      %c0_24 = arith.constant 0 : index
      %c0_25 = arith.constant 0 : index
      %51 = vector.load %arg3[%c0_23, %c0_24, %c0_25] : memref<1x64x32xbf16, #tpu.memory_space<vmem>>, vector<1x64x32xbf16>
      %52 = vector.shape_cast %51 : vector<1x64x32xbf16> to vector<64x32xbf16>
      %c0_26 = arith.constant 0 : index
      %c0_27 = arith.constant 0 : index
      %53 = vector.load %arg5[%c0_26, %c0_27] : memref<32x64xbf16, #tpu.memory_space<vmem>>, vector<32x64xbf16>
      %cst_28 = arith.constant dense<0.000000e+00> : vector<64x64xf32>
      %54 = tpu.matmul %52, %53, %cst_28 {dimension_numbers = #tpu.dot_dimension_numbers<[1], [0], [0], [1], [0, 0, 1, 1], [], []>} : vector<64x32xbf16>, vector<32x64xbf16>, vector<64x64xf32> -> vector<64x64xf32>
      %55 = arith.truncf %54 : vector<64x64xf32> to vector<64x64xbf16>
      %56 = vector.extract_strided_slice %55 {offsets = [0, 0], sizes = [64, 8], strides = [1, 1]} : vector<64x64xbf16> to vector<64x8xbf16>
      %c0_29 = arith.constant 0 : index
      %c0_30 = arith.constant 0 : index
      %c0_31 = arith.constant 0 : index
      %57 = vector.load %arg9[%c0_29, %c0_30, %c0_31] : memref<4x64x8xbf16, #tpu.memory_space<vmem>>, vector<1x64x8xbf16>
      %58 = vector.shape_cast %57 : vector<1x64x8xbf16> to vector<64x8xbf16>
      %59 = vector.shape_cast %56 : vector<64x8xbf16> to vector<1x64x8xbf16>
      tpu.vector_store %arg9[%c0_29, %c0_30, %c0_31], %59 {strides = array<i32>} : memref<4x64x8xbf16, #tpu.memory_space<vmem>>, vector<1x64x8xbf16>,
      %60 = vector.extract_strided_slice %55 {offsets = [0, 32], sizes = [64, 8], strides = [1, 1]} : vector<64x64xbf16> to vector<64x8xbf16>
      %c0_32 = arith.constant 0 : index
      %c0_33 = arith.constant 0 : index
      %c0_34 = arith.constant 0 : index
      %61 = vector.load %arg10[%c0_32, %c0_33, %c0_34] : memref<4x64x8xbf16, #tpu.memory_space<vmem>>, vector<1x64x8xbf16>
      %62 = vector.shape_cast %61 : vector<1x64x8xbf16> to vector<64x8xbf16>
      %63 = vector.shape_cast %60 : vector<64x8xbf16> to vector<1x64x8xbf16>
      tpu.vector_store %arg10[%c0_32, %c0_33, %c0_34], %63 {strides = array<i32>} : memref<4x64x8xbf16, #tpu.memory_space<vmem>>, vector<1x64x8xbf16>,
      %64 = vector.extract_strided_slice %55 {offsets = [0, 8], sizes = [64, 8], strides = [1, 1]} : vector<64x64xbf16> to vector<64x8xbf16>
      %c1 = arith.constant 1 : index
      %c0_35 = arith.constant 0 : index
      %c0_36 = arith.constant 0 : index
      %65 = vector.load %arg9[%c1, %c0_35, %c0_36] : memref<4x64x8xbf16, #tpu.memory_space<vmem>>, vector<1x64x8xbf16>
      %66 = vector.shape_cast %65 : vector<1x64x8xbf16> to vector<64x8xbf16>
      %67 = vector.shape_cast %64 : vector<64x8xbf16> to vector<1x64x8xbf16>
      tpu.vector_store %arg9[%c1, %c0_35, %c0_36], %67 {strides = array<i32>} : memref<4x64x8xbf16, #tpu.memory_space<vmem>>, vector<1x64x8xbf16>,
      %68 = vector.extract_strided_slice %55 {offsets = [0, 40], sizes = [64, 8], strides = [1, 1]} : vector<64x64xbf16> to vector<64x8xbf16>
      %c1_37 = arith.constant 1 : index
      %c0_38 = arith.constant 0 : index
      %c0_39 = arith.constant 0 : index
      %69 = vector.load %arg10[%c1_37, %c0_38, %c0_39] : memref<4x64x8xbf16, #tpu.memory_space<vmem>>, vector<1x64x8xbf16>
      %70 = vector.shape_cast %69 : vector<1x64x8xbf16> to vector<64x8xbf16>
      %71 = vector.shape_cast %68 : vector<64x8xbf16> to vector<1x64x8xbf16>
      tpu.vector_store %arg10[%c1_37, %c0_38, %c0_39], %71 {strides = array<i32>} : memref<4x64x8xbf16, #tpu.memory_space<vmem>>, vector<1x64x8xbf16>,
      %72 = vector.extract_strided_slice %55 {offsets = [0, 16], sizes = [64, 8], strides = [1, 1]} : vector<64x64xbf16> to vector<64x8xbf16>
      %c2 = arith.constant 2 : index
      %c0_40 = arith.constant 0 : index
      %c0_41 = arith.constant 0 : index
      %73 = vector.load %arg9[%c2, %c0_40, %c0_41] : memref<4x64x8xbf16, #tpu.memory_space<vmem>>, vector<1x64x8xbf16>
      %74 = vector.shape_cast %73 : vector<1x64x8xbf16> to vector<64x8xbf16>
      %75 = vector.shape_cast %72 : vector<64x8xbf16> to vector<1x64x8xbf16>
      tpu.vector_store %arg9[%c2, %c0_40, %c0_41], %75 {strides = array<i32>} : memref<4x64x8xbf16, #tpu.memory_space<vmem>>, vector<1x64x8xbf16>,
      %76 = vector.extract_strided_slice %55 {offsets = [0, 48], sizes = [64, 8], strides = [1, 1]} : vector<64x64xbf16> to vector<64x8xbf16>
      %c2_42 = arith.constant 2 : index
      %c0_43 = arith.constant 0 : index
      %c0_44 = arith.constant 0 : index
      %77 = vector.load %arg10[%c2_42, %c0_43, %c0_44] : memref<4x64x8xbf16, #tpu.memory_space<vmem>>, vector<1x64x8xbf16>
      %78 = vector.shape_cast %77 : vector<1x64x8xbf16> to vector<64x8xbf16>
      %79 = vector.shape_cast %76 : vector<64x8xbf16> to vector<1x64x8xbf16>
      tpu.vector_store %arg10[%c2_42, %c0_43, %c0_44], %79 {strides = array<i32>} : memref<4x64x8xbf16, #tpu.memory_space<vmem>>, vector<1x64x8xbf16>,
      %80 = vector.extract_strided_slice %55 {offsets = [0, 24], sizes = [64, 8], strides = [1, 1]} : vector<64x64xbf16> to vector<64x8xbf16>
      %c3 = arith.constant 3 : index
      %c0_45 = arith.constant 0 : index
      %c0_46 = arith.constant 0 : index
      %81 = vector.load %arg9[%c3, %c0_45, %c0_46] : memref<4x64x8xbf16, #tpu.memory_space<vmem>>, vector<1x64x8xbf16>
      %82 = vector.shape_cast %81 : vector<1x64x8xbf16> to vector<64x8xbf16>
      %83 = vector.shape_cast %80 : vector<64x8xbf16> to vector<1x64x8xbf16>
      tpu.vector_store %arg9[%c3, %c0_45, %c0_46], %83 {strides = array<i32>} : memref<4x64x8xbf16, #tpu.memory_space<vmem>>, vector<1x64x8xbf16>,
      %84 = vector.extract_strided_slice %55 {offsets = [0, 56], sizes = [64, 8], strides = [1, 1]} : vector<64x64xbf16> to vector<64x8xbf16>
      %c3_47 = arith.constant 3 : index
      %c0_48 = arith.constant 0 : index
      %c0_49 = arith.constant 0 : index
      %85 = vector.load %arg10[%c3_47, %c0_48, %c0_49] : memref<4x64x8xbf16, #tpu.memory_space<vmem>>, vector<1x64x8xbf16>
      %86 = vector.shape_cast %85 : vector<1x64x8xbf16> to vector<64x8xbf16>
      %87 = vector.shape_cast %84 : vector<64x8xbf16> to vector<1x64x8xbf16>
      tpu.vector_store %arg10[%c3_47, %c0_48, %c0_49], %87 {strides = array<i32>} : memref<4x64x8xbf16, #tpu.memory_space<vmem>>, vector<1x64x8xbf16>,
    } else {
    }
    %c0 = arith.constant 0 : index
    %c0_1 = arith.constant 0 : index
    %c0_2 = arith.constant 0 : index
    %3 = vector.load %arg2[%c0, %c0_1, %c0_2] : memref<1x64x32xbf16, #tpu.memory_space<vmem>>, vector<1x64x32xbf16>
    %4 = vector.shape_cast %3 : vector<1x64x32xbf16> to vector<64x32xbf16>
    %c0_3 = arith.constant 0 : index
    %c0_4 = arith.constant 0 : index
    %5 = vector.load %arg4[%c0_3, %c0_4] : memref<32x32xbf16, #tpu.memory_space<vmem>>, vector<32x32xbf16>
    %cst = arith.constant dense<0.000000e+00> : vector<64x32xf32>
    %6 = tpu.matmul %4, %5, %cst {dimension_numbers = #tpu.dot_dimension_numbers<[1], [0], [0], [1], [0, 0, 1, 1], [], []>} : vector<64x32xbf16>, vector<32x32xbf16>, vector<64x32xf32> -> vector<64x32xf32>
    %7 = arith.truncf %6 : vector<64x32xf32> to vector<64x32xbf16>
    %8 = vector.extract_strided_slice %7 {offsets = [0, 0], sizes = [64, 8], strides = [1, 1]} : vector<64x32xbf16> to vector<64x8xbf16>
    %9 = vector.extract_strided_slice %7 {offsets = [0, 8], sizes = [64, 8], strides = [1, 1]} : vector<64x32xbf16> to vector<64x8xbf16>
    %10 = vector.extract_strided_slice %7 {offsets = [0, 16], sizes = [64, 8], strides = [1, 1]} : vector<64x32xbf16> to vector<64x8xbf16>
    %11 = vector.extract_strided_slice %7 {offsets = [0, 24], sizes = [64, 8], strides = [1, 1]} : vector<64x32xbf16> to vector<64x8xbf16>
    %12 = vector.shape_cast %8 : vector<64x8xbf16> to vector<1x64x8xbf16>
    %13 = vector.shape_cast %9 : vector<64x8xbf16> to vector<1x64x8xbf16>
    %14 = vector.shape_cast %10 : vector<64x8xbf16> to vector<1x64x8xbf16>
    %15 = vector.shape_cast %11 : vector<64x8xbf16> to vector<1x64x8xbf16>
    %16 = tpu.concatenate %12, %13, %14, %15 in 0 : vector<1x64x8xbf16>, vector<1x64x8xbf16>, vector<1x64x8xbf16>, vector<1x64x8xbf16> -> vector<4x64x8xbf16>
    %c0_5 = arith.constant 0 : index
    %c0_6 = arith.constant 0 : index
    %c0_7 = arith.constant 0 : index
    %17 = vector.load %arg9[%c0_5, %c0_6, %c0_7] : memref<4x64x8xbf16, #tpu.memory_space<vmem>>, vector<4x64x8xbf16>
    "tpu.trace_start"() <{level = 10 : i32, message = "hqd,hkd->hqk"}> : () -> ()
    %cst_8 = arith.constant dense<0.000000e+00> : vector<4x64x64xf32>
    %18 = tpu.matmul %16, %17, %cst_8 {dimension_numbers = #tpu.dot_dimension_numbers<[2], [2], [1], [1], [0, 0, 0, 1, 1, 1], [0], [0]>} : vector<4x64x8xbf16>, vector<4x64x8xbf16>, vector<4x64x64xf32> -> vector<4x64x64xf32>
    "tpu.trace_stop"() : () -> ()
    %cst_9 = arith.constant dense<0xFF800000> : vector<4x64xf32>
    %19 = vector.multi_reduction <maximumf>, %18, %cst_9 [2] : vector<4x64x64xf32> to vector<4x64xf32>
    %20 = vector.shape_cast %19 : vector<4x64xf32> to vector<4x64x1xf32>
    %21 = vector.broadcast %20 : vector<4x64x1xf32> to vector<4x64x64xf32>
    %22 = arith.subf %18, %21 : vector<4x64x64xf32>
    %23 = math.exp %22 : vector<4x64x64xf32>
    %cst_10 = arith.constant dense<0.000000e+00> : vector<4x64xf32>
    %24 = vector.multi_reduction <add>, %23, %cst_10 [2] : vector<4x64x64xf32> to vector<4x64xf32>
    %25 = vector.shape_cast %24 : vector<4x64xf32> to vector<4x64x1xf32>
    %26 = arith.truncf %23 : vector<4x64x64xf32> to vector<4x64x64xbf16>
    %c0_11 = arith.constant 0 : index
    %c0_12 = arith.constant 0 : index
    %c0_13 = arith.constant 0 : index
    %27 = vector.load %arg10[%c0_11, %c0_12, %c0_13] : memref<4x64x8xbf16, #tpu.memory_space<vmem>>, vector<4x64x8xbf16>
    "tpu.trace_start"() <{level = 10 : i32, message = "hqk,hkd->hqd"}> : () -> ()
    %cst_14 = arith.constant dense<0.000000e+00> : vector<4x64x8xf32>
    %28 = tpu.matmul %26, %27, %cst_14 {dimension_numbers = #tpu.dot_dimension_numbers<[2], [1], [1], [2], [0, 0, 0, 1, 1, 2], [0], [0]>} : vector<4x64x64xbf16>, vector<4x64x8xbf16>, vector<4x64x8xf32> -> vector<4x64x8xf32>
    "tpu.trace_stop"() : () -> ()
    %29 = tpu.reciprocal %25 {approx = true} : vector<4x64x1xf32> -> vector<4x64x1xf32>
    %30 = vector.broadcast %29 : vector<4x64x1xf32> to vector<4x64x8xf32>
    %31 = arith.mulf %28, %30 : vector<4x64x8xf32>
    %32 = vector.extract_strided_slice %31 {offsets = [0, 0, 0], sizes = [1, 64, 8], strides = [1, 1, 1]} : vector<4x64x8xf32> to vector<1x64x8xf32>
    %33 = vector.shape_cast %32 : vector<1x64x8xf32> to vector<64x8xf32>
    %34 = vector.extract_strided_slice %31 {offsets = [1, 0, 0], sizes = [1, 64, 8], strides = [1, 1, 1]} : vector<4x64x8xf32> to vector<1x64x8xf32>
    %35 = vector.shape_cast %34 : vector<1x64x8xf32> to vector<64x8xf32>
    %36 = vector.extract_strided_slice %31 {offsets = [2, 0, 0], sizes = [1, 64, 8], strides = [1, 1, 1]} : vector<4x64x8xf32> to vector<1x64x8xf32>
    %37 = vector.shape_cast %36 : vector<1x64x8xf32> to vector<64x8xf32>
    %38 = vector.extract_strided_slice %31 {offsets = [3, 0, 0], sizes = [1, 64, 8], strides = [1, 1, 1]} : vector<4x64x8xf32> to vector<1x64x8xf32>
    %39 = vector.shape_cast %38 : vector<1x64x8xf32> to vector<64x8xf32>
    %40 = tpu.concatenate %33, %35, %37, %39 in 1 : vector<64x8xf32>, vector<64x8xf32>, vector<64x8xf32>, vector<64x8xf32> -> vector<64x32xf32>
    %41 = arith.truncf %40 : vector<64x32xf32> to vector<64x32xbf16>
    %c0_15 = arith.constant 0 : index
    %c0_16 = arith.constant 0 : index
    %42 = vector.load %arg6[%c0_15, %c0_16] : memref<32x32xbf16, #tpu.memory_space<vmem>>, vector<32x32xbf16>
    %cst_17 = arith.constant dense<0.000000e+00> : vector<64x32xf32>
    %43 = tpu.matmul %41, %42, %cst_17 {dimension_numbers = #tpu.dot_dimension_numbers<[1], [0], [0], [1], [0, 0, 1, 1], [], []>} : vector<64x32xbf16>, vector<32x32xbf16>, vector<64x32xf32> -> vector<64x32xf32>
    %c0_18 = arith.constant 0 : index
    %c0_19 = arith.constant 0 : index
    %44 = vector.load %arg7[%c0_18, %c0_19] : memref<1x32xf32, #tpu.memory_space<vmem>>, vector<1x32xf32>
    %45 = vector.broadcast %44 : vector<1x32xf32> to vector<64x32xf32>
    %46 = arith.addf %43, %45 : vector<64x32xf32>
    %47 = arith.truncf %46 : vector<64x32xf32> to vector<64x32xbf16>
    %c0_20 = arith.constant 0 : index
    %c0_21 = arith.constant 0 : index
    %c0_22 = arith.constant 0 : index
    %48 = vector.load %arg8[%c0_20, %c0_21, %c0_22] : memref<1x64x32xbf16, #tpu.memory_space<vmem>>, vector<1x64x32xbf16>
    %49 = vector.shape_cast %48 : vector<1x64x32xbf16> to vector<64x32xbf16>
    %50 = vector.shape_cast %47 : vector<64x32xbf16> to vector<1x64x32xbf16>
    tpu.vector_store %arg8[%c0_20, %c0_21, %c0_22], %50 {strides = array<i32>} : memref<1x64x32xbf16, #tpu.memory_space<vmem>>, vector<1x64x32xbf16>,
    return
  }
  func.func @transform_0(%arg0: i32, %arg1: i32) -> (i32, i32, i32) {
    %c0_i32 = arith.constant 0 : i32
    %c0_i32_0 = arith.constant 0 : i32
    return %arg0, %arg1, %c0_i32 : i32, i32, i32
  }
  func.func @transform_1(%arg0: i32, %arg1: i32) -> (i32, i32, i32) {
    %c0_i32 = arith.constant 0 : i32
    %c0_i32_0 = arith.constant 0 : i32
    %c0_i32_1 = arith.constant 0 : i32
    return %arg0, %c0_i32, %c0_i32_0 : i32, i32, i32
  }
  func.func @transform_2(%arg0: i32, %arg1: i32) -> (i32, i32) {
    %c0_i32 = arith.constant 0 : i32
    %c0_i32_0 = arith.constant 0 : i32
    %c0_i32_1 = arith.constant 0 : i32
    return %c0_i32, %c0_i32_0 : i32, i32
  }
  func.func @transform_3(%arg0: i32, %arg1: i32) -> (i32, i32) {
    %c0_i32 = arith.constant 0 : i32
    %c0_i32_0 = arith.constant 0 : i32
    %c0_i32_1 = arith.constant 0 : i32
    return %c0_i32, %c0_i32_0 : i32, i32
  }
  func.func @transform_4(%arg0: i32, %arg1: i32) -> (i32, i32) {
    %c0_i32 = arith.constant 0 : i32
    %c0_i32_0 = arith.constant 0 : i32
    %c0_i32_1 = arith.constant 0 : i32
    return %c0_i32, %c0_i32_0 : i32, i32
  }
  func.func @transform_5(%arg0: i32, %arg1: i32) -> (i32, i32) {
    %c0_i32 = arith.constant 0 : i32
    %c0_i32_0 = arith.constant 0 : i32
    %c0_i32_1 = arith.constant 0 : i32
    return %c0_i32, %c0_i32_0 : i32, i32
  }
  func.func @transform_6(%arg0: i32, %arg1: i32) -> (i32, i32, i32) {
    %c0_i32 = arith.constant 0 : i32
    %c0_i32_0 = arith.constant 0 : i32
    return %arg0, %arg1, %c0_i32 : i32, i32, i32
  }
}

</mosaic_0001>

<llo_original>
// kernel: tpu_custom_call.1
$region0: #{tpu_custom_call.1}
  #allocation0 [shape = 'u32[]', space=smem, size = 0x4, offset = 0x4, fixed_abs, tag = 'smem constant byte address 0x4 - core index']
  #allocation1 [shape = 'u32[144,128]{1,0:T(1,128)}', space=vmem, size = 0x12000, scoped, tag = 'internal scratch']
  #allocation2 [shape = 'bf16[4,64,8]{2,1,0:T(8,128)(2,1)}', space=vmem, size = 0x10000, scoped, tag = 'scratch operand']
  #allocation3 [shape = 'bf16[4,64,8]{2,1,0:T(8,128)(2,1)}', space=vmem, size = 0x10000, scoped, tag = 'scratch operand']
  %s0 = inlined_call_operand.vmem [shape: bf16[2,64,32], index: 0, kind: input, shape index: {}]
  %s1 = inlined_call_operand.vmem [shape: bf16[2,64,32], index: 1, kind: input, shape index: {}]
  %s2 = inlined_call_operand.vmem [shape: bf16[32,32], index: 2, kind: input, shape index: {}]
  %s3 = inlined_call_operand.vmem [shape: bf16[32,64], index: 3, kind: input, shape index: {}]
  %s4 = inlined_call_operand.vmem [shape: bf16[32,32], index: 4, kind: input, shape index: {}]
  %s5 = inlined_call_operand.vmem [shape: f32[1,32], index: 5, kind: input, shape index: {}]
  %s6 = inlined_call_operand.vmem [shape: bf16[2,64,32], index: 6, kind: output, shape index: {}]
  %s7 = sld [smem:[#allocation0]]
  $region61: #{tpu_custom_call.1} parent=0
    _
  %s9 = ssub.s32 1, %s7
  %s10 = scalar_select 0, %s9, %s7
  loop: start=0, step=1, limit=4
  $region2: #{tpu_custom_call.1} parent=0 // loop_pre_header
    _
  $region3: #{tpu_custom_call.1} parent=0 // loop_header
    %s12 = sphi 0, %s16
    %p13 = scmp.ge.s32.totalorder %s12, 4
    %s19 = sphi 0, %s31
    %s20 = sphi 0, %s27
    %s21 = sphi 0, %s19
    %s22 = sphi 0, %s20
    %s23 = sphi 0, %s21
    %s24 = sphi 0, %s22
    %s36 = sphi 0, %s38
    %s39 = sphi 0, %s36
    %s40 = sphi 0, %s39
    %s56 = sphi 0, %s40
    %s62 = sphi 0, %s64
    %s65 = sphi 0, %s62
    %s66 = sphi 0, %s65
    %s82 = sphi 0, %s66
    %s86 = sphi 0, %s86
    %s88 = sphi 0, %s86
    %s89 = sphi 0, %s88
    %s103 = sphi 0, %s89
    %s107 = sphi 0, %s107
    %s109 = sphi 0, %s107
    %s110 = sphi 0, %s109
    %s124 = sphi 0, %s110
    %s128 = sphi 0, %s128
    %s130 = sphi 0, %s128
    %s131 = sphi 0, %s130
    %s145 = sphi 0, %s131
    %s149 = sphi 0, %s149
    %s151 = sphi 0, %s149
    %s152 = sphi 0, %s151
    %s166 = sphi 0, %s152
    %s174 = sphi 0, %s176
    %s177 = sphi 0, %s174
    %s178 = sphi 0, %s177
    %s194 = sphi 0, %s178
  $region4: #{tpu_custom_call.1} parent=0 // loop_header_branch
    %15 = sbr.rel (%p13) target = $region8
  $region5: #{tpu_custom_call.1} parent=0 // loop_body
    %s17 = ssub.s32 %s12, 1
    %s18 = ssub.s32 %s12, 2
    %s25 = sadd.s32 1, %s20
    %p26 = scmp.ge.s32.totalorder %s25, 1
    %s27 = scalar_select %p26, 0, %s25
    %s28 = sadd.s32 1, %s19
    %s29 = scalar_select %p26, %s28, %s19
    %p30 = scmp.ge.s32.totalorder %s29, 2
    %s31 = scalar_select %p30, 0, %s29
    %s32 = ssub.s32 %s19, %s31
    %s33 = ssub.s32 %s20, %s27
    %s34 = sor.u32 %s32, %s33
    %p35 = scmp.eq.s32.totalorder %s34, 0
    %s37 = sadd.s32 %s36, 1
    %s38 = scalar_select %p35, %s36, %s37
    %p41 = pneg %p35
    %p42 = scmp.eq.s32.totalorder %s12, 1
    %p43 = por %p41, %p42
    %p44 = scmp.ne.s32.totalorder %s36, %s39
    %p45 = scmp.eq.s32.totalorder %s12, 0
    %p46 = por %p44, %p45
    %p47 = scmp.ne.s32.totalorder %s36, %s39
    %p48 = scmp.eq.s32.totalorder %s17, 1
    %p49 = por %p47, %p48
    %p50 = scmp.ne.s32.totalorder %s39, %s40
    %p51 = scmp.eq.s32.totalorder %s17, 0
    %p52 = por %p50, %p51
    %p53 = scmp.ne.s32.totalorder %s39, %s40
    %p54 = scmp.eq.s32.totalorder %s18, 1
    %p55 = por %p53, %p54
    %p57 = scmp.ne.s32.totalorder %s40, %s56
    %p58 = scmp.eq.s32.totalorder %s18, 0
    %p59 = por %p57, %p58
    %s60 = ssub.s32 %s19, %s31
    %p61 = scmp.eq.s32.totalorder %s60, 0
    %s63 = sadd.s32 %s62, 1
    %s64 = scalar_select %p61, %s62, %s63
    %p67 = pneg %p61
    %p68 = scmp.eq.s32.totalorder %s12, 1
    %p69 = por %p67, %p68
    %p70 = scmp.ne.s32.totalorder %s62, %s65
    %p71 = scmp.eq.s32.totalorder %s12, 0
    %p72 = por %p70, %p71
    %p73 = scmp.ne.s32.totalorder %s62, %s65
    %p74 = scmp.eq.s32.totalorder %s17, 1
    %p75 = por %p73, %p74
    %p76 = scmp.ne.s32.totalorder %s65, %s66
    %p77 = scmp.eq.s32.totalorder %s17, 0
    %p78 = por %p76, %p77
    %p79 = scmp.ne.s32.totalorder %s65, %s66
    %p80 = scmp.eq.s32.totalorder %s18, 1
    %p81 = por %p79, %p80
    %p83 = scmp.ne.s32.totalorder %s66, %s82
    %p84 = scmp.eq.s32.totalorder %s18, 0
    %p85 = por %p83, %p84
    %s87 = sadd.s32 %s86, 1
    %p90 = scmp.eq.s32.totalorder %s12, 1
    %p91 = scmp.ne.s32.totalorder %s86, %s88
    %p92 = scmp.eq.s32.totalorder %s12, 0
    %p93 = por %p91, %p92
    %p94 = scmp.ne.s32.totalorder %s86, %s88
    %p95 = scmp.eq.s32.totalorder %s17, 1
    %p96 = por %p94, %p95
    %p97 = scmp.ne.s32.totalorder %s88, %s89
    %p98 = scmp.eq.s32.totalorder %s17, 0
    %p99 = por %p97, %p98
    %p100 = scmp.ne.s32.totalorder %s88, %s89
    %p101 = scmp.eq.s32.totalorder %s18, 1
    %p102 = por %p100, %p101
    %p104 = scmp.ne.s32.totalorder %s89, %s103
    %p105 = scmp.eq.s32.totalorder %s18, 0
    %p106 = por %p104, %p105
    %s108 = sadd.s32 %s107, 1
    %p111 = scmp.eq.s32.totalorder %s12, 1
    %p112 = scmp.ne.s32.totalorder %s107, %s109
    %p113 = scmp.eq.s32.totalorder %s12, 0
    %p114 = por %p112, %p113
    %p115 = scmp.ne.s32.totalorder %s107, %s109
    %p116 = scmp.eq.s32.totalorder %s17, 1
    %p117 = por %p115, %p116
    %p118 = scmp.ne.s32.totalorder %s109, %s110
    %p119 = scmp.eq.s32.totalorder %s17, 0
    %p120 = por %p118, %p119
    %p121 = scmp.ne.s32.totalorder %s109, %s110
    %p122 = scmp.eq.s32.totalorder %s18, 1
    %p123 = por %p121, %p122
    %p125 = scmp.ne.s32.totalorder %s110, %s124
    %p126 = scmp.eq.s32.totalorder %s18, 0
    %p127 = por %p125, %p126
    %s129 = sadd.s32 %s128, 1
    %p132 = scmp.eq.s32.totalorder %s12, 1
    %p133 = scmp.ne.s32.totalorder %s128, %s130
    %p134 = scmp.eq.s32.totalorder %s12, 0
    %p135 = por %p133, %p134
    %p136 = scmp.ne.s32.totalorder %s128, %s130
    %p137 = scmp.eq.s32.totalorder %s17, 1
    %p138 = por %p136, %p137
    %p139 = scmp.ne.s32.totalorder %s130, %s131
    %p140 = scmp.eq.s32.totalorder %s17, 0
    %p141 = por %p139, %p140
    %p142 = scmp.ne.s32.totalorder %s130, %s131
    %p143 = scmp.eq.s32.totalorder %s18, 1
    %p144 = por %p142, %p143
    %p146 = scmp.ne.s32.totalorder %s131, %s145
    %p147 = scmp.eq.s32.totalorder %s18, 0
    %p148 = por %p146, %p147
    %s150 = sadd.s32 %s149, 1
    %p153 = scmp.eq.s32.totalorder %s12, 1
    %p154 = scmp.ne.s32.totalorder %s149, %s151
    %p155 = scmp.eq.s32.totalorder %s12, 0
    %p156 = por %p154, %p155
    %p157 = scmp.ne.s32.totalorder %s149, %s151
    %p158 = scmp.eq.s32.totalorder %s17, 1
    %p159 = por %p157, %p158
    %p160 = scmp.ne.s32.totalorder %s151, %s152
    %p161 = scmp.eq.s32.totalorder %s17, 0
    %p162 = por %p160, %p161
    %p163 = scmp.ne.s32.totalorder %s151, %s152
    %p164 = scmp.eq.s32.totalorder %s18, 1
    %p165 = por %p163, %p164
    %p167 = scmp.ne.s32.totalorder %s152, %s166
    %p168 = scmp.eq.s32.totalorder %s18, 0
    %p169 = por %p167, %p168
    %s170 = ssub.s32 %s19, %s31
    %s171 = ssub.s32 %s20, %s27
    %s172 = sor.u32 %s170, %s171
    %p173 = scmp.eq.s32.totalorder %s172, 0
    %s175 = sadd.s32 %s174, 1
    %s176 = scalar_select %p173, %s174, %s175
    %p179 = pneg %p173
    %p180 = scmp.eq.s32.totalorder %s12, 1
    %p181 = por %p179, %p180
    %p182 = scmp.ne.s32.totalorder %s174, %s177
    %p183 = scmp.eq.s32.totalorder %s12, 0
    %p184 = por %p182, %p183
    %p185 = scmp.ne.s32.totalorder %s174, %s177
    %p186 = scmp.eq.s32.totalorder %s17, 1
    %p187 = por %p185, %p186
    %p188 = scmp.ne.s32.totalorder %s177, %s178
    %p189 = scmp.eq.s32.totalorder %s17, 0
    %p190 = por %p188, %p189
    %p191 = scmp.ne.s32.totalorder %s177, %s178
    %p192 = scmp.eq.s32.totalorder %s18, 1
    %p193 = por %p191, %p192
    %p195 = scmp.ne.s32.totalorder %s178, %s194
    %p196 = scmp.eq.s32.totalorder %s18, 0
    %p197 = por %p195, %p196
    %p198 = scmp.le.s32.totalorder 1, %s12
    %p199 = scmp.lt.s32.totalorder %s12, 3
    %p200 = pnand %p198, %p199
    %p201 = pneg %p200
    // Predicated region
    $region9: #{tpu_custom_call.1} parent=5 // pred_check
      _
    $region10: #{tpu_custom_call.1} parent=5 // pred_check_branch
      %203 = sbr.rel (%p200) target = $region12
    $region11: #{tpu_custom_call.1} parent=5 // pred_region
      %s204 = ssub.s32 %s12, 1
      // Predicated region
      $region13: #{tpu_custom_call.1} parent=11 // pred_check
        %p205 = pneg %p99
      $region14: #{tpu_custom_call.1} parent=11 // pred_check_branch
        %207 = sbr.rel (%p205) target = $region16
      $region15: #{tpu_custom_call.1} parent=11 // pred_region
        _
      $region16: #{tpu_custom_call.1} parent=11 // pred_fallthru
        _
      // Predicated region
      $region17: #{tpu_custom_call.1} parent=11 // pred_check
        %p208 = pneg %p120
      $region18: #{tpu_custom_call.1} parent=11 // pred_check_branch
        %210 = sbr.rel (%p208) target = $region20
      $region19: #{tpu_custom_call.1} parent=11 // pred_region
        _
      $region20: #{tpu_custom_call.1} parent=11 // pred_fallthru
        _
      // Predicated region
      $region21: #{tpu_custom_call.1} parent=11 // pred_check
        %p211 = pneg %p141
      $region22: #{tpu_custom_call.1} parent=11 // pred_check_branch
        %213 = sbr.rel (%p211) target = $region24
      $region23: #{tpu_custom_call.1} parent=11 // pred_region
        _
      $region24: #{tpu_custom_call.1} parent=11 // pred_fallthru
        _
      // Predicated region
      $region25: #{tpu_custom_call.1} parent=11 // pred_check
        %p214 = pneg %p162
      $region26: #{tpu_custom_call.1} parent=11 // pred_check_branch
        %216 = sbr.rel (%p214) target = $region28
      $region27: #{tpu_custom_call.1} parent=11 // pred_region
        _
      $region28: #{tpu_custom_call.1} parent=11 // pred_fallthru
        _
    $region12: #{tpu_custom_call.1} parent=5 // pred_fallthru
      _
    %p217 = scmp.lt.s32.totalorder %s12, 2
    // Predicated region
    $region29: #{tpu_custom_call.1} parent=5 // pred_check
      %p218 = pneg %p217
    $region30: #{tpu_custom_call.1} parent=5 // pred_check_branch
      %220 = sbr.rel (%p218) target = $region32
    $region31: #{tpu_custom_call.1} parent=5 // pred_region
      // Predicated region
      $region33: #{tpu_custom_call.1} parent=31 // pred_check
        %p221 = pneg %p46
      $region34: #{tpu_custom_call.1} parent=31 // pred_check_branch
        %223 = sbr.rel (%p221) target = $region36
      $region35: #{tpu_custom_call.1} parent=31 // pred_region
        %s224 = smul.u32 8, %s20
        %p225 = scmp.lt.s32.totalorder %s19, 1
        %s226 = scalar_select %p225, %s19, 1
        %p227 = scmp.lt.s32.totalorder %s224, 7
        %s228 = scalar_select %p227, %s224, 7
        %s229 = smul.addr %s226, 8
        %s230 = sadd.s32 %s228, %s229
        %s231 = smul.addr %s230, 4
        %s232 = scalar_lea.vmem %s0, %s231
        %s233 = smul.u32 8, %s20
      $region36: #{tpu_custom_call.1} parent=31 // pred_fallthru
        _
      // Predicated region
      $region37: #{tpu_custom_call.1} parent=31 // pred_check
        %p234 = pneg %p72
      $region38: #{tpu_custom_call.1} parent=31 // pred_check_branch
        %236 = sbr.rel (%p234) target = $region40
      $region39: #{tpu_custom_call.1} parent=31 // pred_region
        %p237 = scmp.lt.s32.totalorder %s19, 1
        %s238 = scalar_select %p237, %s19, 1
        %s239 = smul.addr %s238, 8
        %s240 = smul.addr %s239, 4
        %s241 = scalar_lea.vmem %s1, %s240
      $region40: #{tpu_custom_call.1} parent=31 // pred_fallthru
        _
    $region32: #{tpu_custom_call.1} parent=5 // pred_fallthru
      _
    %p242 = scmp.le.s32.totalorder 1, %s12
    %p243 = scmp.lt.s32.totalorder %s12, 3
    %p244 = pnand %p242, %p243
    %p245 = pneg %p244
    // Predicated region
    $region41: #{tpu_custom_call.1} parent=5 // pred_check
      _
    $region42: #{tpu_custom_call.1} parent=5 // pred_check_branch
      %247 = sbr.rel (%p244) target = $region44
    $region43: #{tpu_custom_call.1} parent=5 // pred_region
      %s248 = ssub.s32 %s12, 1
      %s249 = smul.u32 8, %s22
      %p250 = scmp.lt.s32.totalorder %s21, 1
      %s251 = scalar_select %p250, %s21, 1
      %p252 = scmp.lt.s32.totalorder %s249, 7
      %s253 = scalar_select %p252, %s249, 7
      %s254 = smul.addr %s251, 8
      %s255 = sadd.s32 %s253, %s254
      %s256 = smul.addr %s255, 4
      %s257 = scalar_lea.vmem %s0, %s256
      %p258 = pneg %p52
      %p259 = pneg %p49
      %p260 = scmp.lt.s32.totalorder %s21, 1
      %s261 = scalar_select %p260, %s21, 1
      %s262 = smul.addr %s261, 8
      %s263 = smul.addr %s262, 4
      %s264 = scalar_lea.vmem %s1, %s263
      %p265 = pneg %p78
      %p266 = pneg %p75
      %p267 = pneg %p99
      %p268 = pneg %p96
      %p269 = pneg %p120
      %p270 = pneg %p117
      %p271 = pneg %p141
      %p272 = pneg %p138
      %p273 = pneg %p162
      %p274 = pneg %p159
      %p275 = pneg %p190
      %p276 = pneg %p187
      %s277 = smul.u32 8, %s22
      %p278 = scmp.lt.s32.totalorder %s21, 1
      %s279 = scalar_select %p278, %s21, 1
      %p280 = scmp.lt.s32.totalorder %s277, 7
      %s281 = scalar_select %p280, %s277, 7
      %s282 = smul.addr %s279, 8
      %s283 = sadd.s32 %s281, %s282
      %s284 = smul.addr %s283, 4
      %s285 = scalar_lea.vmem %s6, %s284
      %s286 = smul.u32 8, %s22
      %p287 = scmp.lt.s32.totalorder %s21, 1
      %s288 = scalar_select %p287, %s21, 1
      %p289 = scmp.lt.s32.totalorder %s286, 7
      %s290 = scalar_select %p289, %s286, 7
      %s291 = smul.addr %s288, 8
      %s292 = sadd.s32 %s290, %s291
      %s293 = smul.addr %s292, 4
      %s294 = scalar_lea.vmem %s0, %s293
      %s295 = smul.u32 8, %s22
      %p296 = scmp.lt.s32.totalorder %s21, 1
      %s297 = scalar_select %p296, %s21, 1
      %s298 = smul.addr %s297, 8
      %s299 = smul.addr %s298, 4
      %s300 = scalar_lea.vmem %s1, %s299
      %s301 = smul.u32 8, %s22
      %p302 = scmp.lt.s32.totalorder %s21, 1
      %s303 = scalar_select %p302, %s21, 1
      %p304 = scmp.lt.s32.totalorder %s301, 7
      %s305 = scalar_select %p304, %s301, 7
      %s306 = smul.addr %s303, 8
      %s307 = sadd.s32 %s305, %s306
      %s308 = smul.addr %s307, 4
      %s309 = scalar_lea.vmem %s6, %s308
      %s310 = smul.u32 8, %s22
      %p312 = scmp.eq.s32.totalorder %s22, 0
      // Predicated region
      $region45: #{tpu_custom_call.1} parent=43 // pred_check
        %p313 = pneg %p312
      $region46: #{tpu_custom_call.1} parent=43 // pred_check_branch
        %315 = sbr.rel (%p313) target = $region48
      $region47: #{tpu_custom_call.1} parent=43 // pred_region
        %v316 = vld [vmem:[%s300] sm:$0xf]
        %v317 = vld [vmem:[%s300 + $0x4] sm:$0xf]
        %v318 = vld [vmem:[%s300 + $0x8] sm:$0xf]
        %v319 = vld [vmem:[%s300 + $0xc] sm:$0xf]
        %v320 = vld [vmem:[%s300 + $0x10] sm:$0xf]
        %v321 = vld [vmem:[%s300 + $0x14] sm:$0xf]
        %v322 = vld [vmem:[%s300 + $0x18] sm:$0xf]
        %v323 = vld [vmem:[%s300 + $0x1c] sm:$0xf]
        %v324 = vld [vmem:[%s3] sm:$0xf]
        %v325 = vld [vmem:[%s3 + $0x4] sm:$0xf]
        %v326 = vld [vmem:[%s3 + $0x8] sm:$0xf]
        %v327 = vld [vmem:[%s3 + $0xc] sm:$0xf]
        %v336 = vunpack.c.l.b16 %v316
        %v337 = vunpack.c.l.b16 %v317
        %v338 = vunpack.c.l.b16 %v318
        %v339 = vunpack.c.l.b16 %v319
        %v340 = vunpack.c.l.b16 %v320
        %v341 = vunpack.c.l.b16 %v321
        %v342 = vunpack.c.l.b16 %v322
        %v343 = vunpack.c.l.b16 %v323
        %v344 = vpack.c.b16 %v337, %v336
        %v345 = vpack.c.b16 %v339, %v338
        %v346 = vpack.c.b16 %v341, %v340
        %v347 = vpack.c.b16 %v343, %v342
        %v352 = vunpack.c.l.b16 %v324
        %v353 = vunpack.c.l.b16 %v325
        %v354 = vunpack.c.l.b16 %v326
        %v355 = vunpack.c.l.b16 %v327
        %v356 = vpack.c.b16 %v353, %v352
        %v357 = vpack.c.b16 %v355, %v354
        %vm360 = vcmask 261120
        %v362 = vsel %vm360, %v344, 0
        %v365 = vsel %vm360, %v345, 0
        %v368 = vsel %vm360, %v346, 0
        %v371 = vsel %vm360, %v347, 0
        %373 = vmatprep.subr.bf16.mxu0 0
        %374 = vmatpush1.bf16.msra.mxu0 0
        %375 = vmatprep.subr.bf16.mxu0 0
        %376 = vmatpush1.bf16.msra.mxu0 0
        %377 = vmatprep.subr.bf16.mxu0 0
        %378 = vmatpush1.bf16.msra.mxu0 0
        %379 = vmatprep.subr.bf16.mxu0 0
        %380 = vmatpush1.bf16.msra.mxu0 0
        %381 = vmatprep.subr.bf16.mxu0 0
        %382 = vmatpush1.bf16.msra.mxu0 0
        %383 = vmatprep.subr.bf16.mxu0 0
        %384 = vmatpush1.bf16.msra.mxu0 0
        %385 = vmatprep.subr.bf16.mxu0 0
        %386 = vmatpush1.bf16.msra.mxu0 %v357
        %387 = vmatprep.subr.bf16.mxu0 0
        %388 = vmatpush1.bf16.msra.mxu0 %v356
        %389 = vmatprep.subr.bf16.mxu0 0
        %390 = vmatpush2.bf16.msra.mxu0 0
        %391 = vmatprep.subr.bf16.mxu0 0
        %392 = vmatpush2.bf16.msra.mxu0 0
        %393 = vmatprep.subr.bf16.mxu0 0
        %394 = vmatpush2.bf16.msra.mxu0 0
        %395 = vmatprep.subr.bf16.mxu0 0
        %396 = vmatpush2.bf16.msra.mxu0 0
        %397 = vmatprep.subr.bf16.mxu0 0
        %398 = vmatpush2.bf16.msra.mxu0 0
        %399 = vmatprep.subr.bf16.mxu0 0
        %400 = vmatpush2.bf16.msra.mxu0 0
        %401 = vmatprep.subr.bf16.mxu0 0
        %402 = vmatpush2.bf16.msra.mxu0 0
        %403 = vmatprep.subr.bf16.mxu0 0
        %404 = vmatpush2.bf16.msra.mxu0 0
        %405 = vmatprep.mubr.bf16.mxu0 0
        %406 = vmatmul.mubr.bf16.gmra.mxu0 %v362
        %v407 = vpop.f32.mrf.mxu0
        %v408 = vadd.f32 0.0, %v407
        %v409 = vpop.f32.mrf.mxu0
        %v410 = vpop.f32.mrf.mxu0
        %v411 = vadd.f32 0.0, %v410
        %v412 = vpop.f32.mrf.mxu0
        %413 = vmatprep.mubr.bf16.mxu0 0
        %414 = vmatmul.mubr.bf16.gmra.mxu0 %v365
        %v415 = vpop.f32.mrf.mxu0
        %v416 = vadd.f32 0.0, %v415
        %v417 = vpop.f32.mrf.mxu0
        %v418 = vpop.f32.mrf.mxu0
        %v419 = vadd.f32 0.0, %v418
        %v420 = vpop.f32.mrf.mxu0
        %421 = vmatprep.mubr.bf16.mxu0 0
        %422 = vmatmul.mubr.bf16.gmra.mxu0 %v368
        %v423 = vpop.f32.mrf.mxu0
        %v424 = vadd.f32 0.0, %v423
        %v425 = vpop.f32.mrf.mxu0
        %v426 = vpop.f32.mrf.mxu0
        %v427 = vadd.f32 0.0, %v426
        %v428 = vpop.f32.mrf.mxu0
        %429 = vmatprep.mubr.bf16.mxu0 0
        %430 = vmatmul.mubr.bf16.gmra.mxu0 %v371
        %v431 = vpop.f32.mrf.mxu0
        %v432 = vadd.f32 0.0, %v431
        %v433 = vpop.f32.mrf.mxu0
        %v434 = vpop.f32.mrf.mxu0
        %v435 = vadd.f32 0.0, %v434
        %v436 = vpop.f32.mrf.mxu0
        %437 = vdwg.mxu0
        %v438 = vpack.c.bf16 %v411, %v408
        %v439 = vpack.c.bf16 %v419, %v416
        %v440 = vpack.c.bf16 %v427, %v424
        %v441 = vpack.c.bf16 %v435, %v432
        %v446 = vunpack.c.l.b16 %v438
        %v447 = vunpack.c.h.b16 %v438
        %v448 = vunpack.c.l.b16 %v439
        %v449 = vunpack.c.h.b16 %v439
        %v450 = vunpack.c.l.b16 %v440
        %v451 = vunpack.c.h.b16 %v440
        %v452 = vunpack.c.l.b16 %v441
        %v453 = vunpack.c.h.b16 %v441
        %v454 = vpack.c.b16 %v446, %v446
        %v455 = vpack.c.b16 %v447, %v447
        %v456 = vpack.c.b16 %v448, %v448
        %v457 = vpack.c.b16 %v449, %v449
        %v458 = vpack.c.b16 %v450, %v450
        %v459 = vpack.c.b16 %v451, %v451
        %v460 = vpack.c.b16 %v452, %v452
        %v461 = vpack.c.b16 %v453, %v453
        %vm470 = vcmask 60416
        %471 = vst.msk [vmem:[#allocation2] sm:$0xf] %vm470, %v454
        %472 = vst.msk [vmem:[#allocation2 + $0x4] sm:$0xf] %vm470, %v455
        %473 = vst.msk [vmem:[#allocation2 + $0x8] sm:$0xf] %vm470, %v456
        %474 = vst.msk [vmem:[#allocation2 + $0xc] sm:$0xf] %vm470, %v457
        %475 = vst.msk [vmem:[#allocation2 + $0x10] sm:$0xf] %vm470, %v458
        %476 = vst.msk [vmem:[#allocation2 + $0x14] sm:$0xf] %vm470, %v459
        %477 = vst.msk [vmem:[#allocation2 + $0x18] sm:$0xf] %vm470, %v460
        %478 = vst.msk [vmem:[#allocation2 + $0x1c] sm:$0xf] %vm470, %v461
        %479 = vrot.lane.b32.xlu0 %v454, 96
        %v480 = vpop.permute.xlu0 %479
        %481 = vrot.lane.b32.xlu0 %v455, 96
        %v482 = vpop.permute.xlu0 %481
        %483 = vrot.lane.b32.xlu0 %v456, 96
        %v484 = vpop.permute.xlu0 %483
        %485 = vrot.lane.b32.xlu0 %v457, 96
        %v486 = vpop.permute.xlu0 %485
        %487 = vrot.lane.b32.xlu0 %v458, 96
        %v488 = vpop.permute.xlu0 %487
        %489 = vrot.lane.b32.xlu0 %v459, 96
        %v490 = vpop.permute.xlu0 %489
        %491 = vrot.lane.b32.xlu0 %v460, 96
        %v492 = vpop.permute.xlu0 %491
        %493 = vrot.lane.b32.xlu0 %v461, 96
        %v494 = vpop.permute.xlu0 %493
        %503 = vst.msk [vmem:[#allocation3] sm:$0xf] %vm470, %v480
        %504 = vst.msk [vmem:[#allocation3 + $0x4] sm:$0xf] %vm470, %v482
        %505 = vst.msk [vmem:[#allocation3 + $0x8] sm:$0xf] %vm470, %v484
        %506 = vst.msk [vmem:[#allocation3 + $0xc] sm:$0xf] %vm470, %v486
        %507 = vst.msk [vmem:[#allocation3 + $0x10] sm:$0xf] %vm470, %v488
        %508 = vst.msk [vmem:[#allocation3 + $0x14] sm:$0xf] %vm470, %v490
        %509 = vst.msk [vmem:[#allocation3 + $0x18] sm:$0xf] %vm470, %v492
        %510 = vst.msk [vmem:[#allocation3 + $0x1c] sm:$0xf] %vm470, %v494
        %511 = vrot.lane.b32.xlu0 %v454, 120
        %v512 = vpop.permute.xlu0 %511
        %513 = vrot.lane.b32.xlu0 %v455, 120
        %v514 = vpop.permute.xlu0 %513
        %515 = vrot.lane.b32.xlu0 %v456, 120
        %v516 = vpop.permute.xlu0 %515
        %517 = vrot.lane.b32.xlu0 %v457, 120
        %v518 = vpop.permute.xlu0 %517
        %519 = vrot.lane.b32.xlu0 %v458, 120
        %v520 = vpop.permute.xlu0 %519
        %521 = vrot.lane.b32.xlu0 %v459, 120
        %v522 = vpop.permute.xlu0 %521
        %523 = vrot.lane.b32.xlu0 %v460, 120
        %v524 = vpop.permute.xlu0 %523
        %525 = vrot.lane.b32.xlu0 %v461, 120
        %v526 = vpop.permute.xlu0 %525
        %s535 = scalar_lea.vmem [#allocation2], 32
        %536 = vst.msk [vmem:[%s535] sm:$0xf] %vm470, %v512
        %537 = vst.msk [vmem:[%s535 + $0x4] sm:$0xf] %vm470, %v514
        %538 = vst.msk [vmem:[%s535 + $0x8] sm:$0xf] %vm470, %v516
        %539 = vst.msk [vmem:[%s535 + $0xc] sm:$0xf] %vm470, %v518
        %540 = vst.msk [vmem:[%s535 + $0x10] sm:$0xf] %vm470, %v520
        %541 = vst.msk [vmem:[%s535 + $0x14] sm:$0xf] %vm470, %v522
        %542 = vst.msk [vmem:[%s535 + $0x18] sm:$0xf] %vm470, %v524
        %543 = vst.msk [vmem:[%s535 + $0x1c] sm:$0xf] %vm470, %v526
        %544 = vrot.lane.b32.xlu0 %v454, 88
        %v545 = vpop.permute.xlu0 %544
        %546 = vrot.lane.b32.xlu0 %v455, 88
        %v547 = vpop.permute.xlu0 %546
        %548 = vrot.lane.b32.xlu0 %v456, 88
        %v549 = vpop.permute.xlu0 %548
        %550 = vrot.lane.b32.xlu0 %v457, 88
        %v551 = vpop.permute.xlu0 %550
        %552 = vrot.lane.b32.xlu0 %v458, 88
        %v553 = vpop.permute.xlu0 %552
        %554 = vrot.lane.b32.xlu0 %v459, 88
        %v555 = vpop.permute.xlu0 %554
        %556 = vrot.lane.b32.xlu0 %v460, 88
        %v557 = vpop.permute.xlu0 %556
        %558 = vrot.lane.b32.xlu0 %v461, 88
        %v559 = vpop.permute.xlu0 %558
        %s568 = scalar_lea.vmem [#allocation3], 32
        %569 = vst.msk [vmem:[%s568] sm:$0xf] %vm470, %v545
        %570 = vst.msk [vmem:[%s568 + $0x4] sm:$0xf] %vm470, %v547
        %571 = vst.msk [vmem:[%s568 + $0x8] sm:$0xf] %vm470, %v549
        %572 = vst.msk [vmem:[%s568 + $0xc] sm:$0xf] %vm470, %v551
        %573 = vst.msk [vmem:[%s568 + $0x10] sm:$0xf] %vm470, %v553
        %574 = vst.msk [vmem:[%s568 + $0x14] sm:$0xf] %vm470, %v555
        %575 = vst.msk [vmem:[%s568 + $0x18] sm:$0xf] %vm470, %v557
        %576 = vst.msk [vmem:[%s568 + $0x1c] sm:$0xf] %vm470, %v559
        %577 = vrot.lane.b32.xlu0 %v454, 112
        %v578 = vpop.permute.xlu0 %577
        %579 = vrot.lane.b32.xlu0 %v455, 112
        %v580 = vpop.permute.xlu0 %579
        %581 = vrot.lane.b32.xlu0 %v456, 112
        %v582 = vpop.permute.xlu0 %581
        %583 = vrot.lane.b32.xlu0 %v457, 112
        %v584 = vpop.permute.xlu0 %583
        %585 = vrot.lane.b32.xlu0 %v458, 112
        %v586 = vpop.permute.xlu0 %585
        %587 = vrot.lane.b32.xlu0 %v459, 112
        %v588 = vpop.permute.xlu0 %587
        %589 = vrot.lane.b32.xlu0 %v460, 112
        %v590 = vpop.permute.xlu0 %589
        %591 = vrot.lane.b32.xlu0 %v461, 112
        %v592 = vpop.permute.xlu0 %591
        %s601 = scalar_lea.vmem [#allocation2], 64
        %602 = vst.msk [vmem:[%s601] sm:$0xf] %vm470, %v578
        %603 = vst.msk [vmem:[%s601 + $0x4] sm:$0xf] %vm470, %v580
        %604 = vst.msk [vmem:[%s601 + $0x8] sm:$0xf] %vm470, %v582
        %605 = vst.msk [vmem:[%s601 + $0xc] sm:$0xf] %vm470, %v584
        %606 = vst.msk [vmem:[%s601 + $0x10] sm:$0xf] %vm470, %v586
        %607 = vst.msk [vmem:[%s601 + $0x14] sm:$0xf] %vm470, %v588
        %608 = vst.msk [vmem:[%s601 + $0x18] sm:$0xf] %vm470, %v590
        %609 = vst.msk [vmem:[%s601 + $0x1c] sm:$0xf] %vm470, %v592
        %610 = vrot.lane.b32.xlu0 %v454, 80
        %v611 = vpop.permute.xlu0 %610
        %612 = vrot.lane.b32.xlu0 %v455, 80
        %v613 = vpop.permute.xlu0 %612
        %614 = vrot.lane.b32.xlu0 %v456, 80
        %v615 = vpop.permute.xlu0 %614
        %616 = vrot.lane.b32.xlu0 %v457, 80
        %v617 = vpop.permute.xlu0 %616
        %618 = vrot.lane.b32.xlu0 %v458, 80
        %v619 = vpop.permute.xlu0 %618
        %620 = vrot.lane.b32.xlu0 %v459, 80
        %v621 = vpop.permute.xlu0 %620
        %622 = vrot.lane.b32.xlu0 %v460, 80
        %v623 = vpop.permute.xlu0 %622
        %624 = vrot.lane.b32.xlu0 %v461, 80
        %v625 = vpop.permute.xlu0 %624
        %s634 = scalar_lea.vmem [#allocation3], 64
        %635 = vst.msk [vmem:[%s634] sm:$0xf] %vm470, %v611
        %636 = vst.msk [vmem:[%s634 + $0x4] sm:$0xf] %vm470, %v613
        %637 = vst.msk [vmem:[%s634 + $0x8] sm:$0xf] %vm470, %v615
        %638 = vst.msk [vmem:[%s634 + $0xc] sm:$0xf] %vm470, %v617
        %639 = vst.msk [vmem:[%s634 + $0x10] sm:$0xf] %vm470, %v619
        %640 = vst.msk [vmem:[%s634 + $0x14] sm:$0xf] %vm470, %v621
        %641 = vst.msk [vmem:[%s634 + $0x18] sm:$0xf] %vm470, %v623
        %642 = vst.msk [vmem:[%s634 + $0x1c] sm:$0xf] %vm470, %v625
        %643 = vrot.lane.b32.xlu0 %v454, 104
        %v644 = vpop.permute.xlu0 %643
        %645 = vrot.lane.b32.xlu0 %v455, 104
        %v646 = vpop.permute.xlu0 %645
        %647 = vrot.lane.b32.xlu0 %v456, 104
        %v648 = vpop.permute.xlu0 %647
        %649 = vrot.lane.b32.xlu0 %v457, 104
        %v650 = vpop.permute.xlu0 %649
        %651 = vrot.lane.b32.xlu0 %v458, 104
        %v652 = vpop.permute.xlu0 %651
        %653 = vrot.lane.b32.xlu0 %v459, 104
        %v654 = vpop.permute.xlu0 %653
        %655 = vrot.lane.b32.xlu0 %v460, 104
        %v656 = vpop.permute.xlu0 %655
        %657 = vrot.lane.b32.xlu0 %v461, 104
        %v658 = vpop.permute.xlu0 %657
        %s667 = scalar_lea.vmem [#allocation2], 96
        %668 = vst.msk [vmem:[%s667] sm:$0xf] %vm470, %v644
        %669 = vst.msk [vmem:[%s667 + $0x4] sm:$0xf] %vm470, %v646
        %670 = vst.msk [vmem:[%s667 + $0x8] sm:$0xf] %vm470, %v648
        %671 = vst.msk [vmem:[%s667 + $0xc] sm:$0xf] %vm470, %v650
        %672 = vst.msk [vmem:[%s667 + $0x10] sm:$0xf] %vm470, %v652
        %673 = vst.msk [vmem:[%s667 + $0x14] sm:$0xf] %vm470, %v654
        %674 = vst.msk [vmem:[%s667 + $0x18] sm:$0xf] %vm470, %v656
        %675 = vst.msk [vmem:[%s667 + $0x1c] sm:$0xf] %vm470, %v658
        %676 = vrot.lane.b32.xlu0 %v454, 72
        %v677 = vpop.permute.xlu0 %676
        %678 = vrot.lane.b32.xlu0 %v455, 72
        %v679 = vpop.permute.xlu0 %678
        %680 = vrot.lane.b32.xlu0 %v456, 72
        %v681 = vpop.permute.xlu0 %680
        %682 = vrot.lane.b32.xlu0 %v457, 72
        %v683 = vpop.permute.xlu0 %682
        %684 = vrot.lane.b32.xlu0 %v458, 72
        %v685 = vpop.permute.xlu0 %684
        %686 = vrot.lane.b32.xlu0 %v459, 72
        %v687 = vpop.permute.xlu0 %686
        %688 = vrot.lane.b32.xlu0 %v460, 72
        %v689 = vpop.permute.xlu0 %688
        %690 = vrot.lane.b32.xlu0 %v461, 72
        %v691 = vpop.permute.xlu0 %690
        %s700 = scalar_lea.vmem [#allocation3], 96
        %701 = vst.msk [vmem:[%s700] sm:$0xf] %vm470, %v677
        %702 = vst.msk [vmem:[%s700 + $0x4] sm:$0xf] %vm470, %v679
        %703 = vst.msk [vmem:[%s700 + $0x8] sm:$0xf] %vm470, %v681
        %704 = vst.msk [vmem:[%s700 + $0xc] sm:$0xf] %vm470, %v683
        %705 = vst.msk [vmem:[%s700 + $0x10] sm:$0xf] %vm470, %v685
        %706 = vst.msk [vmem:[%s700 + $0x14] sm:$0xf] %vm470, %v687
        %707 = vst.msk [vmem:[%s700 + $0x18] sm:$0xf] %vm470, %v689
        %708 = vst.msk [vmem:[%s700 + $0x1c] sm:$0xf] %vm470, %v691
      $region48: #{tpu_custom_call.1} parent=43 // pred_fallthru
        _
      %v709 = vld [vmem:[%s294] sm:$0xf]
      %v710 = vld [vmem:[%s294 + $0x4] sm:$0xf]
      %v711 = vld [vmem:[%s294 + $0x8] sm:$0xf]
      %v712 = vld [vmem:[%s294 + $0xc] sm:$0xf]
      %v713 = vld [vmem:[%s294 + $0x10] sm:$0xf]
      %v714 = vld [vmem:[%s294 + $0x14] sm:$0xf]
      %v715 = vld [vmem:[%s294 + $0x18] sm:$0xf]
      %v716 = vld [vmem:[%s294 + $0x1c] sm:$0xf]
      %v717 = vld [vmem:[%s2] sm:$0xf]
      %v718 = vld [vmem:[%s2 + $0x4] sm:$0xf]
      %v719 = vld [vmem:[%s2 + $0x8] sm:$0xf]
      %v720 = vld [vmem:[%s2 + $0xc] sm:$0xf]
      %v729 = vunpack.c.l.b16 %v709
      %v730 = vunpack.c.l.b16 %v710
      %v731 = vunpack.c.l.b16 %v711
      %v732 = vunpack.c.l.b16 %v712
      %v733 = vunpack.c.l.b16 %v713
      %v734 = vunpack.c.l.b16 %v714
      %v735 = vunpack.c.l.b16 %v715
      %v736 = vunpack.c.l.b16 %v716
      %v737 = vpack.c.b16 %v730, %v729
      %v738 = vpack.c.b16 %v732, %v731
      %v739 = vpack.c.b16 %v734, %v733
      %v740 = vpack.c.b16 %v736, %v735
      %v745 = vunpack.c.l.b16 %v717
      %v746 = vunpack.c.l.b16 %v718
      %v747 = vunpack.c.l.b16 %v719
      %v748 = vunpack.c.l.b16 %v720
      %v749 = vpack.c.b16 %v746, %v745
      %v750 = vpack.c.b16 %v748, %v747
      %vm753 = vcmask 261120
      %v755 = vsel %vm753, %v737, 0
      %v758 = vsel %vm753, %v738, 0
      %v761 = vsel %vm753, %v739, 0
      %v764 = vsel %vm753, %v740, 0
      %766 = vmatprep.subr.bf16.mxu0 0
      %767 = vmatpush1.bf16.msra.mxu0 0
      %768 = vmatprep.subr.bf16.mxu0 0
      %769 = vmatpush1.bf16.msra.mxu0 0
      %770 = vmatprep.subr.bf16.mxu0 0
      %771 = vmatpush1.bf16.msra.mxu0 0
      %772 = vmatprep.subr.bf16.mxu0 0
      %773 = vmatpush1.bf16.msra.mxu0 0
      %774 = vmatprep.subr.bf16.mxu0 0
      %775 = vmatpush1.bf16.msra.mxu0 0
      %776 = vmatprep.subr.bf16.mxu0 0
      %777 = vmatpush1.bf16.msra.mxu0 0
      %778 = vmatprep.subr.bf16.mxu0 0
      %779 = vmatpush1.bf16.msra.mxu0 %v750
      %780 = vmatprep.subr.bf16.mxu0 0
      %781 = vmatpush1.bf16.msra.mxu0 %v749
      %782 = vmatprep.subr.bf16.mxu0 0
      %783 = vmatpush2.bf16.msra.mxu0 0
      %784 = vmatprep.subr.bf16.mxu0 0
      %785 = vmatpush2.bf16.msra.mxu0 0
      %786 = vmatprep.subr.bf16.mxu0 0
      %787 = vmatpush2.bf16.msra.mxu0 0
      %788 = vmatprep.subr.bf16.mxu0 0
      %789 = vmatpush2.bf16.msra.mxu0 0
      %790 = vmatprep.subr.bf16.mxu0 0
      %791 = vmatpush2.bf16.msra.mxu0 0
      %792 = vmatprep.subr.bf16.mxu0 0
      %793 = vmatpush2.bf16.msra.mxu0 0
      %794 = vmatprep.subr.bf16.mxu0 0
      %795 = vmatpush2.bf16.msra.mxu0 0
      %796 = vmatprep.subr.bf16.mxu0 0
      %797 = vmatpush2.bf16.msra.mxu0 0
      %798 = vmatprep.mubr.bf16.mxu0 0
      %799 = vmatmul.mubr.bf16.gmra.mxu0 %v755
      %v800 = vpop.f32.mrf.mxu0
      %v801 = vadd.f32 0.0, %v800
      %v802 = vpop.f32.mrf.mxu0
      %v803 = vpop.f32.mrf.mxu0
      %v804 = vadd.f32 0.0, %v803
      %v805 = vpop.f32.mrf.mxu0
      %806 = vmatprep.mubr.bf16.mxu0 0
      %807 = vmatmul.mubr.bf16.gmra.mxu0 %v758
      %v808 = vpop.f32.mrf.mxu0
      %v809 = vadd.f32 0.0, %v808
      %v810 = vpop.f32.mrf.mxu0
      %v811 = vpop.f32.mrf.mxu0
      %v812 = vadd.f32 0.0, %v811
      %v813 = vpop.f32.mrf.mxu0
      %814 = vmatprep.mubr.bf16.mxu0 0
      %815 = vmatmul.mubr.bf16.gmra.mxu0 %v761
      %v816 = vpop.f32.mrf.mxu0
      %v817 = vadd.f32 0.0, %v816
      %v818 = vpop.f32.mrf.mxu0
      %v819 = vpop.f32.mrf.mxu0
      %v820 = vadd.f32 0.0, %v819
      %v821 = vpop.f32.mrf.mxu0
      %822 = vmatprep.mubr.bf16.mxu0 0
      %823 = vmatmul.mubr.bf16.gmra.mxu0 %v764
      %v824 = vpop.f32.mrf.mxu0
      %v825 = vadd.f32 0.0, %v824
      %v826 = vpop.f32.mrf.mxu0
      %v827 = vpop.f32.mrf.mxu0
      %v828 = vadd.f32 0.0, %v827
      %v829 = vpop.f32.mrf.mxu0
      %830 = vdwg.mxu0
      %v831 = vpack.c.bf16 %v804, %v801
      %v832 = vpack.c.bf16 %v812, %v809
      %v833 = vpack.c.bf16 %v820, %v817
      %v834 = vpack.c.bf16 %v828, %v825
      %839 = vrot.lane.b32.xlu0 %v831, 120
      %v840 = vpop.permute.xlu0 %839
      %841 = vrot.lane.b32.xlu0 %v832, 120
      %v842 = vpop.permute.xlu0 %841
      %843 = vrot.lane.b32.xlu0 %v833, 120
      %v844 = vpop.permute.xlu0 %843
      %845 = vrot.lane.b32.xlu0 %v834, 120
      %v846 = vpop.permute.xlu0 %845
      %847 = vrot.lane.b32.xlu0 %v831, 112
      %v848 = vpop.permute.xlu0 %847
      %849 = vrot.lane.b32.xlu0 %v832, 112
      %v850 = vpop.permute.xlu0 %849
      %851 = vrot.lane.b32.xlu0 %v833, 112
      %v852 = vpop.permute.xlu0 %851
      %853 = vrot.lane.b32.xlu0 %v834, 112
      %v854 = vpop.permute.xlu0 %853
      %855 = vrot.lane.b32.xlu0 %v831, 104
      %v856 = vpop.permute.xlu0 %855
      %857 = vrot.lane.b32.xlu0 %v832, 104
      %v858 = vpop.permute.xlu0 %857
      %859 = vrot.lane.b32.xlu0 %v833, 104
      %v860 = vpop.permute.xlu0 %859
      %861 = vrot.lane.b32.xlu0 %v834, 104
      %v862 = vpop.permute.xlu0 %861
      %v863 = vld [vmem:[#allocation2] sm:$0xf]
      %v864 = vld [vmem:[#allocation2 + $0x4] sm:$0xf]
      %v865 = vld [vmem:[#allocation2 + $0x8] sm:$0xf]
      %v866 = vld [vmem:[#allocation2 + $0xc] sm:$0xf]
      %v867 = vld [vmem:[#allocation2 + $0x10] sm:$0xf]
      %v868 = vld [vmem:[#allocation2 + $0x14] sm:$0xf]
      %v869 = vld [vmem:[#allocation2 + $0x18] sm:$0xf]
      %v870 = vld [vmem:[#allocation2 + $0x1c] sm:$0xf]
      %v871 = vld [vmem:[#allocation2 + $0x20] sm:$0xf]
      %v872 = vld [vmem:[#allocation2 + $0x24] sm:$0xf]
      %v873 = vld [vmem:[#allocation2 + $0x28] sm:$0xf]
      %v874 = vld [vmem:[#allocation2 + $0x2c] sm:$0xf]
      %v875 = vld [vmem:[#allocation2 + $0x30] sm:$0xf]
      %v876 = vld [vmem:[#allocation2 + $0x34] sm:$0xf]
      %v877 = vld [vmem:[#allocation2 + $0x38] sm:$0xf]
      %v878 = vld [vmem:[#allocation2 + $0x3c] sm:$0xf]
      %v879 = vld [vmem:[#allocation2 + $0x40] sm:$0xf]
      %v880 = vld [vmem:[#allocation2 + $0x44] sm:$0xf]
      %v881 = vld [vmem:[#allocation2 + $0x48] sm:$0xf]
      %v882 = vld [vmem:[#allocation2 + $0x4c] sm:$0xf]
      %v883 = vld [vmem:[#allocation2 + $0x50] sm:$0xf]
      %v884 = vld [vmem:[#allocation2 + $0x54] sm:$0xf]
      %v885 = vld [vmem:[#allocation2 + $0x58] sm:$0xf]
      %v886 = vld [vmem:[#allocation2 + $0x5c] sm:$0xf]
      %v887 = vld [vmem:[#allocation2 + $0x60] sm:$0xf]
      %v888 = vld [vmem:[#allocation2 + $0x64] sm:$0xf]
      %v889 = vld [vmem:[#allocation2 + $0x68] sm:$0xf]
      %v890 = vld [vmem:[#allocation2 + $0x6c] sm:$0xf]
      %v891 = vld [vmem:[#allocation2 + $0x70] sm:$0xf]
      %v892 = vld [vmem:[#allocation2 + $0x74] sm:$0xf]
      %v893 = vld [vmem:[#allocation2 + $0x78] sm:$0xf]
      %v894 = vld [vmem:[#allocation2 + $0x7c] sm:$0xf]
      %v903 = vunpack.c.l.b16 %v863
      %v904 = vunpack.c.l.b16 %v864
      %v905 = vunpack.c.l.b16 %v865
      %v906 = vunpack.c.l.b16 %v866
      %v907 = vunpack.c.l.b16 %v867
      %v908 = vunpack.c.l.b16 %v868
      %v909 = vunpack.c.l.b16 %v869
      %v910 = vunpack.c.l.b16 %v870
      %v911 = vpack.c.b16 %v904, %v903
      %v912 = vpack.c.b16 %v906, %v905
      %v913 = vpack.c.b16 %v908, %v907
      %v914 = vpack.c.b16 %v910, %v909
      %vm915 = vcmask 64512
      %v917 = vsel %vm915, %v831, 0
      %v920 = vsel %vm915, %v832, 0
      %v923 = vsel %vm915, %v833, 0
      %v926 = vsel %vm915, %v834, 0
      %v929 = vsel %vm915, %v911, 0
      %v932 = vsel %vm915, %v912, 0
      %v935 = vsel %vm915, %v913, 0
      %v938 = vsel %vm915, %v914, 0
      %940 = vmatprep.subr.bf16.mxu0 0
      %941 = vmatpush1.bf16.xpose.msra.mxu0 0
      %942 = vmatprep.subr.bf16.mxu0 0
      %943 = vmatpush1.bf16.xpose.msra.mxu0 0
      %944 = vmatprep.subr.bf16.mxu0 0
      %945 = vmatpush1.bf16.xpose.msra.mxu0 0
      %946 = vmatprep.subr.bf16.mxu0 0
      %947 = vmatpush1.bf16.xpose.msra.mxu0 0
      %948 = vmatprep.subr.bf16.mxu0 0
      %949 = vmatpush1.bf16.xpose.msra.mxu0 %v938
      %950 = vmatprep.subr.bf16.mxu0 0
      %951 = vmatpush1.bf16.xpose.msra.mxu0 %v935
      %952 = vmatprep.subr.bf16.mxu0 0
      %953 = vmatpush1.bf16.xpose.msra.mxu0 %v932
      %954 = vmatprep.subr.bf16.mxu0 0
      %955 = vmatpush1.bf16.xpose.msra.mxu0 %v929
      %956 = vmatprep.subr.bf16.mxu0 0
      %957 = vmatpush2.bf16.xpose.msra.mxu0 0
      %958 = vmatprep.subr.bf16.mxu0 0
      %959 = vmatpush2.bf16.xpose.msra.mxu0 0
      %960 = vmatprep.subr.bf16.mxu0 0
      %961 = vmatpush2.bf16.xpose.msra.mxu0 0
      %962 = vmatprep.subr.bf16.mxu0 0
      %963 = vmatpush2.bf16.xpose.msra.mxu0 0
      %964 = vmatprep.subr.bf16.mxu0 0
      %965 = vmatpush2.bf16.xpose.msra.mxu0 0
      %966 = vmatprep.subr.bf16.mxu0 0
      %967 = vmatpush2.bf16.xpose.msra.mxu0 0
      %968 = vmatprep.subr.bf16.mxu0 0
      %969 = vmatpush2.bf16.xpose.msra.mxu0 0
      %970 = vmatprep.subr.bf16.mxu0 0
      %971 = vmatpush2.bf16.xpose.msra.mxu0 0
      %972 = vmatprep.mubr.bf16.mxu0 0
      %973 = vmatmul.mubr.bf16.gmra.mxu0 %v917
      %v974 = vpop.f32.mrf.mxu0
      %v975 = vadd.f32 0.0, %v974
      %v976 = vpop.f32.mrf.mxu0
      %v977 = vpop.f32.mrf.mxu0
      %v978 = vadd.f32 0.0, %v977
      %v979 = vpop.f32.mrf.mxu0
      %980 = vmatprep.mubr.bf16.mxu0 0
      %981 = vmatmul.mubr.bf16.gmra.mxu0 %v920
      %v982 = vpop.f32.mrf.mxu0
      %v983 = vadd.f32 0.0, %v982
      %v984 = vpop.f32.mrf.mxu0
      %v985 = vpop.f32.mrf.mxu0
      %v986 = vadd.f32 0.0, %v985
      %v987 = vpop.f32.mrf.mxu0
      %988 = vmatprep.mubr.bf16.mxu0 0
      %989 = vmatmul.mubr.bf16.gmra.mxu0 %v923
      %v990 = vpop.f32.mrf.mxu0
      %v991 = vadd.f32 0.0, %v990
      %v992 = vpop.f32.mrf.mxu0
      %v993 = vpop.f32.mrf.mxu0
      %v994 = vadd.f32 0.0, %v993
      %v995 = vpop.f32.mrf.mxu0
      %996 = vmatprep.mubr.bf16.mxu0 0
      %997 = vmatmul.mubr.bf16.gmra.mxu0 %v926
      %v998 = vpop.f32.mrf.mxu0
      %v999 = vadd.f32 0.0, %v998
      %v1000 = vpop.f32.mrf.mxu0
      %v1001 = vpop.f32.mrf.mxu0
      %v1002 = vadd.f32 0.0, %v1001
      %v1003 = vpop.f32.mrf.mxu0
      %1004 = vdwg.mxu0
      %v1013 = vunpack.c.l.b16 %v871
      %v1014 = vunpack.c.l.b16 %v872
      %v1015 = vunpack.c.l.b16 %v873
      %v1016 = vunpack.c.l.b16 %v874
      %v1017 = vunpack.c.l.b16 %v875
      %v1018 = vunpack.c.l.b16 %v876
      %v1019 = vunpack.c.l.b16 %v877
      %v1020 = vunpack.c.l.b16 %v878
      %v1021 = vpack.c.b16 %v1014, %v1013
      %v1022 = vpack.c.b16 %v1016, %v1015
      %v1023 = vpack.c.b16 %v1018, %v1017
      %v1024 = vpack.c.b16 %v1020, %v1019
      %v1026 = vsel %vm915, %v840, 0
      %v1029 = vsel %vm915, %v842, 0
      %v1032 = vsel %vm915, %v844, 0
      %v1035 = vsel %vm915, %v846, 0
      %v1038 = vsel %vm915, %v1021, 0
      %v1041 = vsel %vm915, %v1022, 0
      %v1044 = vsel %vm915, %v1023, 0
      %v1047 = vsel %vm915, %v1024, 0
      %1049 = vmatprep.subr.bf16.mxu0 0
      %1050 = vmatpush1.bf16.xpose.msra.mxu0 0
      %1051 = vmatprep.subr.bf16.mxu0 0
      %1052 = vmatpush1.bf16.xpose.msra.mxu0 0
      %1053 = vmatprep.subr.bf16.mxu0 0
      %1054 = vmatpush1.bf16.xpose.msra.mxu0 0
      %1055 = vmatprep.subr.bf16.mxu0 0
      %1056 = vmatpush1.bf16.xpose.msra.mxu0 0
      %1057 = vmatprep.subr.bf16.mxu0 0
      %1058 = vmatpush1.bf16.xpose.msra.mxu0 %v1047
      %1059 = vmatprep.subr.bf16.mxu0 0
      %1060 = vmatpush1.bf16.xpose.msra.mxu0 %v1044
      %1061 = vmatprep.subr.bf16.mxu0 0
      %1062 = vmatpush1.bf16.xpose.msra.mxu0 %v1041
      %1063 = vmatprep.subr.bf16.mxu0 0
      %1064 = vmatpush1.bf16.xpose.msra.mxu0 %v1038
      %1065 = vmatprep.subr.bf16.mxu0 0
      %1066 = vmatpush2.bf16.xpose.msra.mxu0 0
      %1067 = vmatprep.subr.bf16.mxu0 0
      %1068 = vmatpush2.bf16.xpose.msra.mxu0 0
      %1069 = vmatprep.subr.bf16.mxu0 0
      %1070 = vmatpush2.bf16.xpose.msra.mxu0 0
      %1071 = vmatprep.subr.bf16.mxu0 0
      %1072 = vmatpush2.bf16.xpose.msra.mxu0 0
      %1073 = vmatprep.subr.bf16.mxu0 0
      %1074 = vmatpush2.bf16.xpose.msra.mxu0 0
      %1075 = vmatprep.subr.bf16.mxu0 0
      %1076 = vmatpush2.bf16.xpose.msra.mxu0 0
      %1077 = vmatprep.subr.bf16.mxu0 0
      %1078 = vmatpush2.bf16.xpose.msra.mxu0 0
      %1079 = vmatprep.subr.bf16.mxu0 0
      %1080 = vmatpush2.bf16.xpose.msra.mxu0 0
      %1081 = vmatprep.mubr.bf16.mxu0 0
      %1082 = vmatmul.mubr.bf16.gmra.mxu0 %v1026
      %v1083 = vpop.f32.mrf.mxu0
      %v1084 = vadd.f32 0.0, %v1083
      %v1085 = vpop.f32.mrf.mxu0
      %v1086 = vpop.f32.mrf.mxu0
      %v1087 = vadd.f32 0.0, %v1086
      %v1088 = vpop.f32.mrf.mxu0
      %1089 = vmatprep.mubr.bf16.mxu0 0
      %1090 = vmatmul.mubr.bf16.gmra.mxu0 %v1029
      %v1091 = vpop.f32.mrf.mxu0
      %v1092 = vadd.f32 0.0, %v1091
      %v1093 = vpop.f32.mrf.mxu0
      %v1094 = vpop.f32.mrf.mxu0
      %v1095 = vadd.f32 0.0, %v1094
      %v1096 = vpop.f32.mrf.mxu0
      %1097 = vmatprep.mubr.bf16.mxu0 0
      %1098 = vmatmul.mubr.bf16.gmra.mxu0 %v1032
      %v1099 = vpop.f32.mrf.mxu0
      %v1100 = vadd.f32 0.0, %v1099
      %v1101 = vpop.f32.mrf.mxu0
      %v1102 = vpop.f32.mrf.mxu0
      %v1103 = vadd.f32 0.0, %v1102
      %v1104 = vpop.f32.mrf.mxu0
      %1105 = vmatprep.mubr.bf16.mxu0 0
      %1106 = vmatmul.mubr.bf16.gmra.mxu0 %v1035
      %v1107 = vpop.f32.mrf.mxu0
      %v1108 = vadd.f32 0.0, %v1107
      %v1109 = vpop.f32.mrf.mxu0
      %v1110 = vpop.f32.mrf.mxu0
      %v1111 = vadd.f32 0.0, %v1110
      %v1112 = vpop.f32.mrf.mxu0
      %1113 = vdwg.mxu0
      %v1122 = vunpack.c.l.b16 %v879
      %v1123 = vunpack.c.l.b16 %v880
      %v1124 = vunpack.c.l.b16 %v881
      %v1125 = vunpack.c.l.b16 %v882
      %v1126 = vunpack.c.l.b16 %v883
      %v1127 = vunpack.c.l.b16 %v884
      %v1128 = vunpack.c.l.b16 %v885
      %v1129 = vunpack.c.l.b16 %v886
      %v1130 = vpack.c.b16 %v1123, %v1122
      %v1131 = vpack.c.b16 %v1125, %v1124
      %v1132 = vpack.c.b16 %v1127, %v1126
      %v1133 = vpack.c.b16 %v1129, %v1128
      %v1135 = vsel %vm915, %v848, 0
      %v1138 = vsel %vm915, %v850, 0
      %v1141 = vsel %vm915, %v852, 0
      %v1144 = vsel %vm915, %v854, 0
      %v1147 = vsel %vm915, %v1130, 0
      %v1150 = vsel %vm915, %v1131, 0
      %v1153 = vsel %vm915, %v1132, 0
      %v1156 = vsel %vm915, %v1133, 0
      %1158 = vmatprep.subr.bf16.mxu0 0
      %1159 = vmatpush1.bf16.xpose.msra.mxu0 0
      %1160 = vmatprep.subr.bf16.mxu0 0
      %1161 = vmatpush1.bf16.xpose.msra.mxu0 0
      %1162 = vmatprep.subr.bf16.mxu0 0
      %1163 = vmatpush1.bf16.xpose.msra.mxu0 0
      %1164 = vmatprep.subr.bf16.mxu0 0
      %1165 = vmatpush1.bf16.xpose.msra.mxu0 0
      %1166 = vmatprep.subr.bf16.mxu0 0
      %1167 = vmatpush1.bf16.xpose.msra.mxu0 %v1156
      %1168 = vmatprep.subr.bf16.mxu0 0
      %1169 = vmatpush1.bf16.xpose.msra.mxu0 %v1153
      %1170 = vmatprep.subr.bf16.mxu0 0
      %1171 = vmatpush1.bf16.xpose.msra.mxu0 %v1150
      %1172 = vmatprep.subr.bf16.mxu0 0
      %1173 = vmatpush1.bf16.xpose.msra.mxu0 %v1147
      %1174 = vmatprep.subr.bf16.mxu0 0
      %1175 = vmatpush2.bf16.xpose.msra.mxu0 0
      %1176 = vmatprep.subr.bf16.mxu0 0
      %1177 = vmatpush2.bf16.xpose.msra.mxu0 0
      %1178 = vmatprep.subr.bf16.mxu0 0
      %1179 = vmatpush2.bf16.xpose.msra.mxu0 0
      %1180 = vmatprep.subr.bf16.mxu0 0
      %1181 = vmatpush2.bf16.xpose.msra.mxu0 0
      %1182 = vmatprep.subr.bf16.mxu0 0
      %1183 = vmatpush2.bf16.xpose.msra.mxu0 0
      %1184 = vmatprep.subr.bf16.mxu0 0
      %1185 = vmatpush2.bf16.xpose.msra.mxu0 0
      %1186 = vmatprep.subr.bf16.mxu0 0
      %1187 = vmatpush2.bf16.xpose.msra.mxu0 0
      %1188 = vmatprep.subr.bf16.mxu0 0
      %1189 = vmatpush2.bf16.xpose.msra.mxu0 0
      %1190 = vmatprep.mubr.bf16.mxu0 0
      %1191 = vmatmul.mubr.bf16.gmra.mxu0 %v1135
      %v1192 = vpop.f32.mrf.mxu0
      %v1193 = vadd.f32 0.0, %v1192
      %v1194 = vpop.f32.mrf.mxu0
      %v1195 = vpop.f32.mrf.mxu0
      %v1196 = vadd.f32 0.0, %v1195
      %v1197 = vpop.f32.mrf.mxu0
      %1198 = vmatprep.mubr.bf16.mxu0 0
      %1199 = vmatmul.mubr.bf16.gmra.mxu0 %v1138
      %v1200 = vpop.f32.mrf.mxu0
      %v1201 = vadd.f32 0.0, %v1200
      %v1202 = vpop.f32.mrf.mxu0
      %v1203 = vpop.f32.mrf.mxu0
      %v1204 = vadd.f32 0.0, %v1203
      %v1205 = vpop.f32.mrf.mxu0
      %1206 = vmatprep.mubr.bf16.mxu0 0
      %1207 = vmatmul.mubr.bf16.gmra.mxu0 %v1141
      %v1208 = vpop.f32.mrf.mxu0
      %v1209 = vadd.f32 0.0, %v1208
      %v1210 = vpop.f32.mrf.mxu0
      %v1211 = vpop.f32.mrf.mxu0
      %v1212 = vadd.f32 0.0, %v1211
      %v1213 = vpop.f32.mrf.mxu0
      %1214 = vmatprep.mubr.bf16.mxu0 0
      %1215 = vmatmul.mubr.bf16.gmra.mxu0 %v1144
      %v1216 = vpop.f32.mrf.mxu0
      %v1217 = vadd.f32 0.0, %v1216
      %v1218 = vpop.f32.mrf.mxu0
      %v1219 = vpop.f32.mrf.mxu0
      %v1220 = vadd.f32 0.0, %v1219
      %v1221 = vpop.f32.mrf.mxu0
      %1222 = vdwg.mxu0
      %v1231 = vunpack.c.l.b16 %v887
      %v1232 = vunpack.c.l.b16 %v888
      %v1233 = vunpack.c.l.b16 %v889
      %v1234 = vunpack.c.l.b16 %v890
      %v1235 = vunpack.c.l.b16 %v891
      %v1236 = vunpack.c.l.b16 %v892
      %v1237 = vunpack.c.l.b16 %v893
      %v1238 = vunpack.c.l.b16 %v894
      %v1239 = vpack.c.b16 %v1232, %v1231
      %v1240 = vpack.c.b16 %v1234, %v1233
      %v1241 = vpack.c.b16 %v1236, %v1235
      %v1242 = vpack.c.b16 %v1238, %v1237
      %v1244 = vsel %vm915, %v856, 0
      %v1247 = vsel %vm915, %v858, 0
      %v1250 = vsel %vm915, %v860, 0
      %v1253 = vsel %vm915, %v862, 0
      %v1256 = vsel %vm915, %v1239, 0
      %v1259 = vsel %vm915, %v1240, 0
      %v1262 = vsel %vm915, %v1241, 0
      %v1265 = vsel %vm915, %v1242, 0
      %1267 = vmatprep.subr.bf16.mxu0 0
      %1268 = vmatpush1.bf16.xpose.msra.mxu0 0
      %1269 = vmatprep.subr.bf16.mxu0 0
      %1270 = vmatpush1.bf16.xpose.msra.mxu0 0
      %1271 = vmatprep.subr.bf16.mxu0 0
      %1272 = vmatpush1.bf16.xpose.msra.mxu0 0
      %1273 = vmatprep.subr.bf16.mxu0 0
      %1274 = vmatpush1.bf16.xpose.msra.mxu0 0
      %1275 = vmatprep.subr.bf16.mxu0 0
      %1276 = vmatpush1.bf16.xpose.msra.mxu0 %v1265
      %1277 = vmatprep.subr.bf16.mxu0 0
      %1278 = vmatpush1.bf16.xpose.msra.mxu0 %v1262
      %1279 = vmatprep.subr.bf16.mxu0 0
      %1280 = vmatpush1.bf16.xpose.msra.mxu0 %v1259
      %1281 = vmatprep.subr.bf16.mxu0 0
      %1282 = vmatpush1.bf16.xpose.msra.mxu0 %v1256
      %1283 = vmatprep.subr.bf16.mxu0 0
      %1284 = vmatpush2.bf16.xpose.msra.mxu0 0
      %1285 = vmatprep.subr.bf16.mxu0 0
      %1286 = vmatpush2.bf16.xpose.msra.mxu0 0
      %1287 = vmatprep.subr.bf16.mxu0 0
      %1288 = vmatpush2.bf16.xpose.msra.mxu0 0
      %1289 = vmatprep.subr.bf16.mxu0 0
      %1290 = vmatpush2.bf16.xpose.msra.mxu0 0
      %1291 = vmatprep.subr.bf16.mxu0 0
      %1292 = vmatpush2.bf16.xpose.msra.mxu0 0
      %1293 = vmatprep.subr.bf16.mxu0 0
      %1294 = vmatpush2.bf16.xpose.msra.mxu0 0
      %1295 = vmatprep.subr.bf16.mxu0 0
      %1296 = vmatpush2.bf16.xpose.msra.mxu0 0
      %1297 = vmatprep.subr.bf16.mxu0 0
      %1298 = vmatpush2.bf16.xpose.msra.mxu0 0
      %1299 = vmatprep.mubr.bf16.mxu0 0
      %1300 = vmatmul.mubr.bf16.gmra.mxu0 %v1244
      %v1301 = vpop.f32.mrf.mxu0
      %v1302 = vadd.f32 0.0, %v1301
      %v1303 = vpop.f32.mrf.mxu0
      %v1304 = vpop.f32.mrf.mxu0
      %v1305 = vadd.f32 0.0, %v1304
      %v1306 = vpop.f32.mrf.mxu0
      %1307 = vmatprep.mubr.bf16.mxu0 0
      %1308 = vmatmul.mubr.bf16.gmra.mxu0 %v1247
      %v1309 = vpop.f32.mrf.mxu0
      %v1310 = vadd.f32 0.0, %v1309
      %v1311 = vpop.f32.mrf.mxu0
      %v1312 = vpop.f32.mrf.mxu0
      %v1313 = vadd.f32 0.0, %v1312
      %v1314 = vpop.f32.mrf.mxu0
      %1315 = vmatprep.mubr.bf16.mxu0 0
      %1316 = vmatmul.mubr.bf16.gmra.mxu0 %v1250
      %v1317 = vpop.f32.mrf.mxu0
      %v1318 = vadd.f32 0.0, %v1317
      %v1319 = vpop.f32.mrf.mxu0
      %v1320 = vpop.f32.mrf.mxu0
      %v1321 = vadd.f32 0.0, %v1320
      %v1322 = vpop.f32.mrf.mxu0
      %1323 = vmatprep.mubr.bf16.mxu0 0
      %1324 = vmatmul.mubr.bf16.gmra.mxu0 %v1253
      %v1325 = vpop.f32.mrf.mxu0
      %v1326 = vadd.f32 0.0, %v1325
      %v1327 = vpop.f32.mrf.mxu0
      %v1328 = vpop.f32.mrf.mxu0
      %v1329 = vadd.f32 0.0, %v1328
      %v1330 = vpop.f32.mrf.mxu0
      %1331 = vdwg.mxu0
      %vm1332 = vcmask 523264
      %v1333 = vsel %vm1332, %v975, -inf
      %1334 = vmax.xlane.f32.xlu0 %v1333
      %v1335 = vpop.xlane.xlu0 %1334
      %v1336 = vsel %vm1332, %v978, -inf
      %1337 = vmax.xlane.f32.xlu0 %v1336
      %v1338 = vpop.xlane.xlu0 %1337
      %v1339 = vsel %vm1332, %v983, -inf
      %1340 = vmax.xlane.f32.xlu0 %v1339
      %v1341 = vpop.xlane.xlu0 %1340
      %v1342 = vsel %vm1332, %v986, -inf
      %1343 = vmax.xlane.f32.xlu0 %v1342
      %v1344 = vpop.xlane.xlu0 %1343
      %v1345 = vsel %vm1332, %v991, -inf
      %1346 = vmax.xlane.f32.xlu0 %v1345
      %v1347 = vpop.xlane.xlu0 %1346
      %v1348 = vsel %vm1332, %v994, -inf
      %1349 = vmax.xlane.f32.xlu0 %v1348
      %v1350 = vpop.xlane.xlu0 %1349
      %v1351 = vsel %vm1332, %v999, -inf
      %1352 = vmax.xlane.f32.xlu0 %v1351
      %v1353 = vpop.xlane.xlu0 %1352
      %v1354 = vsel %vm1332, %v1002, -inf
      %1355 = vmax.xlane.f32.xlu0 %v1354
      %v1356 = vpop.xlane.xlu0 %1355
      %v1357 = vsel %vm1332, %v1084, -inf
      %1358 = vmax.xlane.f32.xlu0 %v1357
      %v1359 = vpop.xlane.xlu0 %1358
      %v1360 = vsel %vm1332, %v1087, -inf
      %1361 = vmax.xlane.f32.xlu0 %v1360
      %v1362 = vpop.xlane.xlu0 %1361
      %v1363 = vsel %vm1332, %v1092, -inf
      %1364 = vmax.xlane.f32.xlu0 %v1363
      %v1365 = vpop.xlane.xlu0 %1364
      %v1366 = vsel %vm1332, %v1095, -inf
      %1367 = vmax.xlane.f32.xlu0 %v1366
      %v1368 = vpop.xlane.xlu0 %1367
      %v1369 = vsel %vm1332, %v1100, -inf
      %1370 = vmax.xlane.f32.xlu0 %v1369
      %v1371 = vpop.xlane.xlu0 %1370
      %v1372 = vsel %vm1332, %v1103, -inf
      %1373 = vmax.xlane.f32.xlu0 %v1372
      %v1374 = vpop.xlane.xlu0 %1373
      %v1375 = vsel %vm1332, %v1108, -inf
      %1376 = vmax.xlane.f32.xlu0 %v1375
      %v1377 = vpop.xlane.xlu0 %1376
      %v1378 = vsel %vm1332, %v1111, -inf
      %1379 = vmax.xlane.f32.xlu0 %v1378
      %v1380 = vpop.xlane.xlu0 %1379
      %v1381 = vsel %vm1332, %v1193, -inf
      %1382 = vmax.xlane.f32.xlu0 %v1381
      %v1383 = vpop.xlane.xlu0 %1382
      %v1384 = vsel %vm1332, %v1196, -inf
      %1385 = vmax.xlane.f32.xlu0 %v1384
      %v1386 = vpop.xlane.xlu0 %1385
      %v1387 = vsel %vm1332, %v1201, -inf
      %1388 = vmax.xlane.f32.xlu0 %v1387
      %v1389 = vpop.xlane.xlu0 %1388
      %v1390 = vsel %vm1332, %v1204, -inf
      %1391 = vmax.xlane.f32.xlu0 %v1390
      %v1392 = vpop.xlane.xlu0 %1391
      %v1393 = vsel %vm1332, %v1209, -inf
      %1394 = vmax.xlane.f32.xlu0 %v1393
      %v1395 = vpop.xlane.xlu0 %1394
      %v1396 = vsel %vm1332, %v1212, -inf
      %1397 = vmax.xlane.f32.xlu0 %v1396
      %v1398 = vpop.xlane.xlu0 %1397
      %v1399 = vsel %vm1332, %v1217, -inf
      %1400 = vmax.xlane.f32.xlu0 %v1399
      %v1401 = vpop.xlane.xlu0 %1400
      %v1402 = vsel %vm1332, %v1220, -inf
      %1403 = vmax.xlane.f32.xlu0 %v1402
      %v1404 = vpop.xlane.xlu0 %1403
      %v1405 = vsel %vm1332, %v1302, -inf
      %1406 = vmax.xlane.f32.xlu0 %v1405
      %v1407 = vpop.xlane.xlu0 %1406
      %v1408 = vsel %vm1332, %v1305, -inf
      %1409 = vmax.xlane.f32.xlu0 %v1408
      %v1410 = vpop.xlane.xlu0 %1409
      %v1411 = vsel %vm1332, %v1310, -inf
      %1412 = vmax.xlane.f32.xlu0 %v1411
      %v1413 = vpop.xlane.xlu0 %1412
      %v1414 = vsel %vm1332, %v1313, -inf
      %1415 = vmax.xlane.f32.xlu0 %v1414
      %v1416 = vpop.xlane.xlu0 %1415
      %v1417 = vsel %vm1332, %v1318, -inf
      %1418 = vmax.xlane.f32.xlu0 %v1417
      %v1419 = vpop.xlane.xlu0 %1418
      %v1420 = vsel %vm1332, %v1321, -inf
      %1421 = vmax.xlane.f32.xlu0 %v1420
      %v1422 = vpop.xlane.xlu0 %1421
      %v1423 = vsel %vm1332, %v1326, -inf
      %1424 = vmax.xlane.f32.xlu0 %v1423
      %v1425 = vpop.xlane.xlu0 %1424
      %v1426 = vsel %vm1332, %v1329, -inf
      %1427 = vmax.xlane.f32.xlu0 %v1426
      %v1428 = vpop.xlane.xlu0 %1427
      %v1429 = vsub.f32 %v975, %v1335
      %v1430 = vsub.f32 %v978, %v1338
      %v1431 = vsub.f32 %v983, %v1341
      %v1432 = vsub.f32 %v986, %v1344
      %v1433 = vsub.f32 %v991, %v1347
      %v1434 = vsub.f32 %v994, %v1350
      %v1435 = vsub.f32 %v999, %v1353
      %v1436 = vsub.f32 %v1002, %v1356
      %v1437 = vsub.f32 %v1084, %v1359
      %v1438 = vsub.f32 %v1087, %v1362
      %v1439 = vsub.f32 %v1092, %v1365
      %v1440 = vsub.f32 %v1095, %v1368
      %v1441 = vsub.f32 %v1100, %v1371
      %v1442 = vsub.f32 %v1103, %v1374
      %v1443 = vsub.f32 %v1108, %v1377
      %v1444 = vsub.f32 %v1111, %v1380
      %v1445 = vsub.f32 %v1193, %v1383
      %v1446 = vsub.f32 %v1196, %v1386
      %v1447 = vsub.f32 %v1201, %v1389
      %v1448 = vsub.f32 %v1204, %v1392
      %v1449 = vsub.f32 %v1209, %v1395
      %v1450 = vsub.f32 %v1212, %v1398
      %v1451 = vsub.f32 %v1217, %v1401
      %v1452 = vsub.f32 %v1220, %v1404
      %v1453 = vsub.f32 %v1302, %v1407
      %v1454 = vsub.f32 %v1305, %v1410
      %v1455 = vsub.f32 %v1310, %v1413
      %v1456 = vsub.f32 %v1313, %v1416
      %v1457 = vsub.f32 %v1318, %v1419
      %v1458 = vsub.f32 %v1321, %v1422
      %v1459 = vsub.f32 %v1326, %v1425
      %v1460 = vsub.f32 %v1329, %v1428
      %v1461 = vmul.f32 %v1429, 1.442695
      %v1462 = vpow.pop %v1461
      %v1463 = vmul.f32 %v1430, 1.442695
      %v1464 = vpow.pop %v1463
      %v1465 = vmul.f32 %v1431, 1.442695
      %v1466 = vpow.pop %v1465
      %v1467 = vmul.f32 %v1432, 1.442695
      %v1468 = vpow.pop %v1467
      %v1469 = vmul.f32 %v1433, 1.442695
      %v1470 = vpow.pop %v1469
      %v1471 = vmul.f32 %v1434, 1.442695
      %v1472 = vpow.pop %v1471
      %v1473 = vmul.f32 %v1435, 1.442695
      %v1474 = vpow.pop %v1473
      %v1475 = vmul.f32 %v1436, 1.442695
      %v1476 = vpow.pop %v1475
      %v1477 = vmul.f32 %v1437, 1.442695
      %v1478 = vpow.pop %v1477
      %v1479 = vmul.f32 %v1438, 1.442695
      %v1480 = vpow.pop %v1479
      %v1481 = vmul.f32 %v1439, 1.442695
      %v1482 = vpow.pop %v1481
      %v1483 = vmul.f32 %v1440, 1.442695
      %v1484 = vpow.pop %v1483
      %v1485 = vmul.f32 %v1441, 1.442695
      %v1486 = vpow.pop %v1485
      %v1487 = vmul.f32 %v1442, 1.442695
      %v1488 = vpow.pop %v1487
      %v1489 = vmul.f32 %v1443, 1.442695
      %v1490 = vpow.pop %v1489
      %v1491 = vmul.f32 %v1444, 1.442695
      %v1492 = vpow.pop %v1491
      %v1493 = vmul.f32 %v1445, 1.442695
      %v1494 = vpow.pop %v1493
      %v1495 = vmul.f32 %v1446, 1.442695
      %v1496 = vpow.pop %v1495
      %v1497 = vmul.f32 %v1447, 1.442695
      %v1498 = vpow.pop %v1497
      %v1499 = vmul.f32 %v1448, 1.442695
      %v1500 = vpow.pop %v1499
      %v1501 = vmul.f32 %v1449, 1.442695
      %v1502 = vpow.pop %v1501
      %v1503 = vmul.f32 %v1450, 1.442695
      %v1504 = vpow.pop %v1503
      %v1505 = vmul.f32 %v1451, 1.442695
      %v1506 = vpow.pop %v1505
      %v1507 = vmul.f32 %v1452, 1.442695
      %v1508 = vpow.pop %v1507
      %v1509 = vmul.f32 %v1453, 1.442695
      %v1510 = vpow.pop %v1509
      %v1511 = vmul.f32 %v1454, 1.442695
      %v1512 = vpow.pop %v1511
      %v1513 = vmul.f32 %v1455, 1.442695
      %v1514 = vpow.pop %v1513
      %v1515 = vmul.f32 %v1456, 1.442695
      %v1516 = vpow.pop %v1515
      %v1517 = vmul.f32 %v1457, 1.442695
      %v1518 = vpow.pop %v1517
      %v1519 = vmul.f32 %v1458, 1.442695
      %v1520 = vpow.pop %v1519
      %v1521 = vmul.f32 %v1459, 1.442695
      %v1522 = vpow.pop %v1521
      %v1523 = vmul.f32 %v1460, 1.442695
      %v1524 = vpow.pop %v1523
      %v1525 = vsel %vm1332, %v1462, 0.0
      %1526 = vadd.xlane.f32.xlu0 %v1525
      %v1527 = vpop.xlane.xlu0 %1526
      %v1528 = vsel %vm1332, %v1464, 0.0
      %1529 = vadd.xlane.f32.xlu0 %v1528
      %v1530 = vpop.xlane.xlu0 %1529
      %v1531 = vsel %vm1332, %v1466, 0.0
      %1532 = vadd.xlane.f32.xlu0 %v1531
      %v1533 = vpop.xlane.xlu0 %1532
      %v1534 = vsel %vm1332, %v1468, 0.0
      %1535 = vadd.xlane.f32.xlu0 %v1534
      %v1536 = vpop.xlane.xlu0 %1535
      %v1537 = vsel %vm1332, %v1470, 0.0
      %1538 = vadd.xlane.f32.xlu0 %v1537
      %v1539 = vpop.xlane.xlu0 %1538
      %v1540 = vsel %vm1332, %v1472, 0.0
      %1541 = vadd.xlane.f32.xlu0 %v1540
      %v1542 = vpop.xlane.xlu0 %1541
      %v1543 = vsel %vm1332, %v1474, 0.0
      %1544 = vadd.xlane.f32.xlu0 %v1543
      %v1545 = vpop.xlane.xlu0 %1544
      %v1546 = vsel %vm1332, %v1476, 0.0
      %1547 = vadd.xlane.f32.xlu0 %v1546
      %v1548 = vpop.xlane.xlu0 %1547
      %v1549 = vsel %vm1332, %v1478, 0.0
      %1550 = vadd.xlane.f32.xlu0 %v1549
      %v1551 = vpop.xlane.xlu0 %1550
      %v1552 = vsel %vm1332, %v1480, 0.0
      %1553 = vadd.xlane.f32.xlu0 %v1552
      %v1554 = vpop.xlane.xlu0 %1553
      %v1555 = vsel %vm1332, %v1482, 0.0
      %1556 = vadd.xlane.f32.xlu0 %v1555
      %v1557 = vpop.xlane.xlu0 %1556
      %v1558 = vsel %vm1332, %v1484, 0.0
      %1559 = vadd.xlane.f32.xlu0 %v1558
      %v1560 = vpop.xlane.xlu0 %1559
      %v1561 = vsel %vm1332, %v1486, 0.0
      %1562 = vadd.xlane.f32.xlu0 %v1561
      %v1563 = vpop.xlane.xlu0 %1562
      %v1564 = vsel %vm1332, %v1488, 0.0
      %1565 = vadd.xlane.f32.xlu0 %v1564
      %v1566 = vpop.xlane.xlu0 %1565
      %v1567 = vsel %vm1332, %v1490, 0.0
      %1568 = vadd.xlane.f32.xlu0 %v1567
      %v1569 = vpop.xlane.xlu0 %1568
      %v1570 = vsel %vm1332, %v1492, 0.0
      %1571 = vadd.xlane.f32.xlu0 %v1570
      %v1572 = vpop.xlane.xlu0 %1571
      %v1573 = vsel %vm1332, %v1494, 0.0
      %1574 = vadd.xlane.f32.xlu0 %v1573
      %v1575 = vpop.xlane.xlu0 %1574
      %v1576 = vsel %vm1332, %v1496, 0.0
      %1577 = vadd.xlane.f32.xlu0 %v1576
      %v1578 = vpop.xlane.xlu0 %1577
      %v1579 = vsel %vm1332, %v1498, 0.0
      %1580 = vadd.xlane.f32.xlu0 %v1579
      %v1581 = vpop.xlane.xlu0 %1580
      %v1582 = vsel %vm1332, %v1500, 0.0
      %1583 = vadd.xlane.f32.xlu0 %v1582
      %v1584 = vpop.xlane.xlu0 %1583
      %v1585 = vsel %vm1332, %v1502, 0.0
      %1586 = vadd.xlane.f32.xlu0 %v1585
      %v1587 = vpop.xlane.xlu0 %1586
      %v1588 = vsel %vm1332, %v1504, 0.0
      %1589 = vadd.xlane.f32.xlu0 %v1588
      %v1590 = vpop.xlane.xlu0 %1589
      %v1591 = vsel %vm1332, %v1506, 0.0
      %1592 = vadd.xlane.f32.xlu0 %v1591
      %v1593 = vpop.xlane.xlu0 %1592
      %v1594 = vsel %vm1332, %v1508, 0.0
      %1595 = vadd.xlane.f32.xlu0 %v1594
      %v1596 = vpop.xlane.xlu0 %1595
      %v1597 = vsel %vm1332, %v1510, 0.0
      %1598 = vadd.xlane.f32.xlu0 %v1597
      %v1599 = vpop.xlane.xlu0 %1598
      %v1600 = vsel %vm1332, %v1512, 0.0
      %1601 = vadd.xlane.f32.xlu0 %v1600
      %v1602 = vpop.xlane.xlu0 %1601
      %v1603 = vsel %vm1332, %v1514, 0.0
      %1604 = vadd.xlane.f32.xlu0 %v1603
      %v1605 = vpop.xlane.xlu0 %1604
      %v1606 = vsel %vm1332, %v1516, 0.0
      %1607 = vadd.xlane.f32.xlu0 %v1606
      %v1608 = vpop.xlane.xlu0 %1607
      %v1609 = vsel %vm1332, %v1518, 0.0
      %1610 = vadd.xlane.f32.xlu0 %v1609
      %v1611 = vpop.xlane.xlu0 %1610
      %v1612 = vsel %vm1332, %v1520, 0.0
      %1613 = vadd.xlane.f32.xlu0 %v1612
      %v1614 = vpop.xlane.xlu0 %1613
      %v1615 = vsel %vm1332, %v1522, 0.0
      %1616 = vadd.xlane.f32.xlu0 %v1615
      %v1617 = vpop.xlane.xlu0 %1616
      %v1618 = vsel %vm1332, %v1524, 0.0
      %1619 = vadd.xlane.f32.xlu0 %v1618
      %v1620 = vpop.xlane.xlu0 %1619
      %v1621 = vpack.c.bf16 %v1464, %v1462
      %v1622 = vpack.c.bf16 %v1468, %v1466
      %v1623 = vpack.c.bf16 %v1472, %v1470
      %v1624 = vpack.c.bf16 %v1476, %v1474
      %v1625 = vpack.c.bf16 %v1480, %v1478
      %v1626 = vpack.c.bf16 %v1484, %v1482
      %v1627 = vpack.c.bf16 %v1488, %v1486
      %v1628 = vpack.c.bf16 %v1492, %v1490
      %v1629 = vpack.c.bf16 %v1496, %v1494
      %v1630 = vpack.c.bf16 %v1500, %v1498
      %v1631 = vpack.c.bf16 %v1504, %v1502
      %v1632 = vpack.c.bf16 %v1508, %v1506
      %v1633 = vpack.c.bf16 %v1512, %v1510
      %v1634 = vpack.c.bf16 %v1516, %v1514
      %v1635 = vpack.c.bf16 %v1520, %v1518
      %v1636 = vpack.c.bf16 %v1524, %v1522
      %v1637 = vld [vmem:[#allocation3] sm:$0xf]
      %v1638 = vld [vmem:[#allocation3 + $0x4] sm:$0xf]
      %v1639 = vld [vmem:[#allocation3 + $0x8] sm:$0xf]
      %v1640 = vld [vmem:[#allocation3 + $0xc] sm:$0xf]
      %v1641 = vld [vmem:[#allocation3 + $0x10] sm:$0xf]
      %v1642 = vld [vmem:[#allocation3 + $0x14] sm:$0xf]
      %v1643 = vld [vmem:[#allocation3 + $0x18] sm:$0xf]
      %v1644 = vld [vmem:[#allocation3 + $0x1c] sm:$0xf]
      %v1645 = vld [vmem:[#allocation3 + $0x20] sm:$0xf]
      %v1646 = vld [vmem:[#allocation3 + $0x24] sm:$0xf]
      %v1647 = vld [vmem:[#allocation3 + $0x28] sm:$0xf]
      %v1648 = vld [vmem:[#allocation3 + $0x2c] sm:$0xf]
      %v1649 = vld [vmem:[#allocation3 + $0x30] sm:$0xf]
      %v1650 = vld [vmem:[#allocation3 + $0x34] sm:$0xf]
      %v1651 = vld [vmem:[#allocation3 + $0x38] sm:$0xf]
      %v1652 = vld [vmem:[#allocation3 + $0x3c] sm:$0xf]
      %v1653 = vld [vmem:[#allocation3 + $0x40] sm:$0xf]
      %v1654 = vld [vmem:[#allocation3 + $0x44] sm:$0xf]
      %v1655 = vld [vmem:[#allocation3 + $0x48] sm:$0xf]
      %v1656 = vld [vmem:[#allocation3 + $0x4c] sm:$0xf]
      %v1657 = vld [vmem:[#allocation3 + $0x50] sm:$0xf]
      %v1658 = vld [vmem:[#allocation3 + $0x54] sm:$0xf]
      %v1659 = vld [vmem:[#allocation3 + $0x58] sm:$0xf]
      %v1660 = vld [vmem:[#allocation3 + $0x5c] sm:$0xf]
      %v1661 = vld [vmem:[#allocation3 + $0x60] sm:$0xf]
      %v1662 = vld [vmem:[#allocation3 + $0x64] sm:$0xf]
      %v1663 = vld [vmem:[#allocation3 + $0x68] sm:$0xf]
      %v1664 = vld [vmem:[#allocation3 + $0x6c] sm:$0xf]
      %v1665 = vld [vmem:[#allocation3 + $0x70] sm:$0xf]
      %v1666 = vld [vmem:[#allocation3 + $0x74] sm:$0xf]
      %v1667 = vld [vmem:[#allocation3 + $0x78] sm:$0xf]
      %v1668 = vld [vmem:[#allocation3 + $0x7c] sm:$0xf]
      %v1677 = vunpack.c.l.b16 %v1637
      %v1678 = vunpack.c.l.b16 %v1638
      %v1679 = vunpack.c.l.b16 %v1639
      %v1680 = vunpack.c.l.b16 %v1640
      %v1681 = vunpack.c.l.b16 %v1641
      %v1682 = vunpack.c.l.b16 %v1642
      %v1683 = vunpack.c.l.b16 %v1643
      %v1684 = vunpack.c.l.b16 %v1644
      %v1685 = vpack.c.b16 %v1678, %v1677
      %v1686 = vpack.c.b16 %v1680, %v1679
      %v1687 = vpack.c.b16 %v1682, %v1681
      %v1688 = vpack.c.b16 %v1684, %v1683
      %v1694 = vsel %vm1332, %v1621, 0
      %v1697 = vsel %vm1332, %v1622, 0
      %v1700 = vsel %vm1332, %v1623, 0
      %v1703 = vsel %vm1332, %v1624, 0
      %1705 = vmatprep.subr.bf16.mxu0 0
      %1706 = vmatpush1.bf16.msra.mxu0 0
      %1707 = vmatprep.subr.bf16.mxu0 0
      %1708 = vmatpush1.bf16.msra.mxu0 0
      %1709 = vmatprep.subr.bf16.mxu0 0
      %1710 = vmatpush1.bf16.msra.mxu0 0
      %1711 = vmatprep.subr.bf16.mxu0 0
      %1712 = vmatpush1.bf16.msra.mxu0 0
      %1713 = vmatprep.subr.bf16.mxu0 0
      %1714 = vmatpush1.bf16.msra.mxu0 %v1688
      %1715 = vmatprep.subr.bf16.mxu0 0
      %1716 = vmatpush1.bf16.msra.mxu0 %v1687
      %1717 = vmatprep.subr.bf16.mxu0 0
      %1718 = vmatpush1.bf16.msra.mxu0 %v1686
      %1719 = vmatprep.subr.bf16.mxu0 0
      %1720 = vmatpush1.bf16.msra.mxu0 %v1685
      %1721 = vmatprep.subr.bf16.mxu0 0
      %1722 = vmatpush2.bf16.msra.mxu0 0
      %1723 = vmatprep.subr.bf16.mxu0 0
      %1724 = vmatpush2.bf16.msra.mxu0 0
      %1725 = vmatprep.subr.bf16.mxu0 0
      %1726 = vmatpush2.bf16.msra.mxu0 0
      %1727 = vmatprep.subr.bf16.mxu0 0
      %1728 = vmatpush2.bf16.msra.mxu0 0
      %1729 = vmatprep.subr.bf16.mxu0 0
      %1730 = vmatpush2.bf16.msra.mxu0 0
      %1731 = vmatprep.subr.bf16.mxu0 0
      %1732 = vmatpush2.bf16.msra.mxu0 0
      %1733 = vmatprep.subr.bf16.mxu0 0
      %1734 = vmatpush2.bf16.msra.mxu0 0
      %1735 = vmatprep.subr.bf16.mxu0 0
      %1736 = vmatpush2.bf16.msra.mxu0 0
      %1737 = vmatprep.mubr.bf16.mxu0 0
      %1738 = vmatmul.mubr.bf16.gmra.mxu0 %v1694
      %v1739 = vpop.f32.mrf.mxu0
      %v1740 = vadd.f32 0.0, %v1739
      %v1741 = vpop.f32.mrf.mxu0
      %v1742 = vpop.f32.mrf.mxu0
      %v1743 = vadd.f32 0.0, %v1742
      %v1744 = vpop.f32.mrf.mxu0
      %1745 = vmatprep.mubr.bf16.mxu0 0
      %1746 = vmatmul.mubr.bf16.gmra.mxu0 %v1697
      %v1747 = vpop.f32.mrf.mxu0
      %v1748 = vadd.f32 0.0, %v1747
      %v1749 = vpop.f32.mrf.mxu0
      %v1750 = vpop.f32.mrf.mxu0
      %v1751 = vadd.f32 0.0, %v1750
      %v1752 = vpop.f32.mrf.mxu0
      %1753 = vmatprep.mubr.bf16.mxu0 0
      %1754 = vmatmul.mubr.bf16.gmra.mxu0 %v1700
      %v1755 = vpop.f32.mrf.mxu0
      %v1756 = vadd.f32 0.0, %v1755
      %v1757 = vpop.f32.mrf.mxu0
      %v1758 = vpop.f32.mrf.mxu0
      %v1759 = vadd.f32 0.0, %v1758
      %v1760 = vpop.f32.mrf.mxu0
      %1761 = vmatprep.mubr.bf16.mxu0 0
      %1762 = vmatmul.mubr.bf16.gmra.mxu0 %v1703
      %v1763 = vpop.f32.mrf.mxu0
      %v1764 = vadd.f32 0.0, %v1763
      %v1765 = vpop.f32.mrf.mxu0
      %v1766 = vpop.f32.mrf.mxu0
      %v1767 = vadd.f32 0.0, %v1766
      %v1768 = vpop.f32.mrf.mxu0
      %1769 = vdwg.mxu0
      %v1778 = vunpack.c.l.b16 %v1645
      %v1779 = vunpack.c.l.b16 %v1646
      %v1780 = vunpack.c.l.b16 %v1647
      %v1781 = vunpack.c.l.b16 %v1648
      %v1782 = vunpack.c.l.b16 %v1649
      %v1783 = vunpack.c.l.b16 %v1650
      %v1784 = vunpack.c.l.b16 %v1651
      %v1785 = vunpack.c.l.b16 %v1652
      %v1786 = vpack.c.b16 %v1779, %v1778
      %v1787 = vpack.c.b16 %v1781, %v1780
      %v1788 = vpack.c.b16 %v1783, %v1782
      %v1789 = vpack.c.b16 %v1785, %v1784
      %v1795 = vsel %vm1332, %v1625, 0
      %v1798 = vsel %vm1332, %v1626, 0
      %v1801 = vsel %vm1332, %v1627, 0
      %v1804 = vsel %vm1332, %v1628, 0
      %1806 = vmatprep.subr.bf16.mxu0 0
      %1807 = vmatpush1.bf16.msra.mxu0 0
      %1808 = vmatprep.subr.bf16.mxu0 0
      %1809 = vmatpush1.bf16.msra.mxu0 0
      %1810 = vmatprep.subr.bf16.mxu0 0
      %1811 = vmatpush1.bf16.msra.mxu0 0
      %1812 = vmatprep.subr.bf16.mxu0 0
      %1813 = vmatpush1.bf16.msra.mxu0 0
      %1814 = vmatprep.subr.bf16.mxu0 0
      %1815 = vmatpush1.bf16.msra.mxu0 %v1789
      %1816 = vmatprep.subr.bf16.mxu0 0
      %1817 = vmatpush1.bf16.msra.mxu0 %v1788
      %1818 = vmatprep.subr.bf16.mxu0 0
      %1819 = vmatpush1.bf16.msra.mxu0 %v1787
      %1820 = vmatprep.subr.bf16.mxu0 0
      %1821 = vmatpush1.bf16.msra.mxu0 %v1786
      %1822 = vmatprep.subr.bf16.mxu0 0
      %1823 = vmatpush2.bf16.msra.mxu0 0
      %1824 = vmatprep.subr.bf16.mxu0 0
      %1825 = vmatpush2.bf16.msra.mxu0 0
      %1826 = vmatprep.subr.bf16.mxu0 0
      %1827 = vmatpush2.bf16.msra.mxu0 0
      %1828 = vmatprep.subr.bf16.mxu0 0
      %1829 = vmatpush2.bf16.msra.mxu0 0
      %1830 = vmatprep.subr.bf16.mxu0 0
      %1831 = vmatpush2.bf16.msra.mxu0 0
      %1832 = vmatprep.subr.bf16.mxu0 0
      %1833 = vmatpush2.bf16.msra.mxu0 0
      %1834 = vmatprep.subr.bf16.mxu0 0
      %1835 = vmatpush2.bf16.msra.mxu0 0
      %1836 = vmatprep.subr.bf16.mxu0 0
      %1837 = vmatpush2.bf16.msra.mxu0 0
      %1838 = vmatprep.mubr.bf16.mxu0 0
      %1839 = vmatmul.mubr.bf16.gmra.mxu0 %v1795
      %v1840 = vpop.f32.mrf.mxu0
      %v1841 = vadd.f32 0.0, %v1840
      %v1842 = vpop.f32.mrf.mxu0
      %v1843 = vpop.f32.mrf.mxu0
      %v1844 = vadd.f32 0.0, %v1843
      %v1845 = vpop.f32.mrf.mxu0
      %1846 = vmatprep.mubr.bf16.mxu0 0
      %1847 = vmatmul.mubr.bf16.gmra.mxu0 %v1798
      %v1848 = vpop.f32.mrf.mxu0
      %v1849 = vadd.f32 0.0, %v1848
      %v1850 = vpop.f32.mrf.mxu0
      %v1851 = vpop.f32.mrf.mxu0
      %v1852 = vadd.f32 0.0, %v1851
      %v1853 = vpop.f32.mrf.mxu0
      %1854 = vmatprep.mubr.bf16.mxu0 0
      %1855 = vmatmul.mubr.bf16.gmra.mxu0 %v1801
      %v1856 = vpop.f32.mrf.mxu0
      %v1857 = vadd.f32 0.0, %v1856
      %v1858 = vpop.f32.mrf.mxu0
      %v1859 = vpop.f32.mrf.mxu0
      %v1860 = vadd.f32 0.0, %v1859
      %v1861 = vpop.f32.mrf.mxu0
      %1862 = vmatprep.mubr.bf16.mxu0 0
      %1863 = vmatmul.mubr.bf16.gmra.mxu0 %v1804
      %v1864 = vpop.f32.mrf.mxu0
      %v1865 = vadd.f32 0.0, %v1864
      %v1866 = vpop.f32.mrf.mxu0
      %v1867 = vpop.f32.mrf.mxu0
      %v1868 = vadd.f32 0.0, %v1867
      %v1869 = vpop.f32.mrf.mxu0
      %1870 = vdwg.mxu0
      %v1879 = vunpack.c.l.b16 %v1653
      %v1880 = vunpack.c.l.b16 %v1654
      %v1881 = vunpack.c.l.b16 %v1655
      %v1882 = vunpack.c.l.b16 %v1656
      %v1883 = vunpack.c.l.b16 %v1657
      %v1884 = vunpack.c.l.b16 %v1658
      %v1885 = vunpack.c.l.b16 %v1659
      %v1886 = vunpack.c.l.b16 %v1660
      %v1887 = vpack.c.b16 %v1880, %v1879
      %v1888 = vpack.c.b16 %v1882, %v1881
      %v1889 = vpack.c.b16 %v1884, %v1883
      %v1890 = vpack.c.b16 %v1886, %v1885
      %v1896 = vsel %vm1332, %v1629, 0
      %v1899 = vsel %vm1332, %v1630, 0
      %v1902 = vsel %vm1332, %v1631, 0
      %v1905 = vsel %vm1332, %v1632, 0
      %1907 = vmatprep.subr.bf16.mxu0 0
      %1908 = vmatpush1.bf16.msra.mxu0 0
      %1909 = vmatprep.subr.bf16.mxu0 0
      %1910 = vmatpush1.bf16.msra.mxu0 0
      %1911 = vmatprep.subr.bf16.mxu0 0
      %1912 = vmatpush1.bf16.msra.mxu0 0
      %1913 = vmatprep.subr.bf16.mxu0 0
      %1914 = vmatpush1.bf16.msra.mxu0 0
      %1915 = vmatprep.subr.bf16.mxu0 0
      %1916 = vmatpush1.bf16.msra.mxu0 %v1890
      %1917 = vmatprep.subr.bf16.mxu0 0
      %1918 = vmatpush1.bf16.msra.mxu0 %v1889
      %1919 = vmatprep.subr.bf16.mxu0 0
      %1920 = vmatpush1.bf16.msra.mxu0 %v1888
      %1921 = vmatprep.subr.bf16.mxu0 0
      %1922 = vmatpush1.bf16.msra.mxu0 %v1887
      %1923 = vmatprep.subr.bf16.mxu0 0
      %1924 = vmatpush2.bf16.msra.mxu0 0
      %1925 = vmatprep.subr.bf16.mxu0 0
      %1926 = vmatpush2.bf16.msra.mxu0 0
      %1927 = vmatprep.subr.bf16.mxu0 0
      %1928 = vmatpush2.bf16.msra.mxu0 0
      %1929 = vmatprep.subr.bf16.mxu0 0
      %1930 = vmatpush2.bf16.msra.mxu0 0
      %1931 = vmatprep.subr.bf16.mxu0 0
      %1932 = vmatpush2.bf16.msra.mxu0 0
      %1933 = vmatprep.subr.bf16.mxu0 0
      %1934 = vmatpush2.bf16.msra.mxu0 0
      %1935 = vmatprep.subr.bf16.mxu0 0
      %1936 = vmatpush2.bf16.msra.mxu0 0
      %1937 = vmatprep.subr.bf16.mxu0 0
      %1938 = vmatpush2.bf16.msra.mxu0 0
      %1939 = vmatprep.mubr.bf16.mxu0 0
      %1940 = vmatmul.mubr.bf16.gmra.mxu0 %v1896
      %v1941 = vpop.f32.mrf.mxu0
      %v1942 = vadd.f32 0.0, %v1941
      %v1943 = vpop.f32.mrf.mxu0
      %v1944 = vpop.f32.mrf.mxu0
      %v1945 = vadd.f32 0.0, %v1944
      %v1946 = vpop.f32.mrf.mxu0
      %1947 = vmatprep.mubr.bf16.mxu0 0
      %1948 = vmatmul.mubr.bf16.gmra.mxu0 %v1899
      %v1949 = vpop.f32.mrf.mxu0
      %v1950 = vadd.f32 0.0, %v1949
      %v1951 = vpop.f32.mrf.mxu0
      %v1952 = vpop.f32.mrf.mxu0
      %v1953 = vadd.f32 0.0, %v1952
      %v1954 = vpop.f32.mrf.mxu0
      %1955 = vmatprep.mubr.bf16.mxu0 0
      %1956 = vmatmul.mubr.bf16.gmra.mxu0 %v1902
      %v1957 = vpop.f32.mrf.mxu0
      %v1958 = vadd.f32 0.0, %v1957
      %v1959 = vpop.f32.mrf.mxu0
      %v1960 = vpop.f32.mrf.mxu0
      %v1961 = vadd.f32 0.0, %v1960
      %v1962 = vpop.f32.mrf.mxu0
      %1963 = vmatprep.mubr.bf16.mxu0 0
      %1964 = vmatmul.mubr.bf16.gmra.mxu0 %v1905
      %v1965 = vpop.f32.mrf.mxu0
      %v1966 = vadd.f32 0.0, %v1965
      %v1967 = vpop.f32.mrf.mxu0
      %v1968 = vpop.f32.mrf.mxu0
      %v1969 = vadd.f32 0.0, %v1968
      %v1970 = vpop.f32.mrf.mxu0
      %1971 = vdwg.mxu0
      %v1980 = vunpack.c.l.b16 %v1661
      %v1981 = vunpack.c.l.b16 %v1662
      %v1982 = vunpack.c.l.b16 %v1663
      %v1983 = vunpack.c.l.b16 %v1664
      %v1984 = vunpack.c.l.b16 %v1665
      %v1985 = vunpack.c.l.b16 %v1666
      %v1986 = vunpack.c.l.b16 %v1667
      %v1987 = vunpack.c.l.b16 %v1668
      %v1988 = vpack.c.b16 %v1981, %v1980
      %v1989 = vpack.c.b16 %v1983, %v1982
      %v1990 = vpack.c.b16 %v1985, %v1984
      %v1991 = vpack.c.b16 %v1987, %v1986
      %v1997 = vsel %vm1332, %v1633, 0
      %v2000 = vsel %vm1332, %v1634, 0
      %v2003 = vsel %vm1332, %v1635, 0
      %v2006 = vsel %vm1332, %v1636, 0
      %2008 = vmatprep.subr.bf16.mxu0 0
      %2009 = vmatpush1.bf16.msra.mxu0 0
      %2010 = vmatprep.subr.bf16.mxu0 0
      %2011 = vmatpush1.bf16.msra.mxu0 0
      %2012 = vmatprep.subr.bf16.mxu0 0
      %2013 = vmatpush1.bf16.msra.mxu0 0
      %2014 = vmatprep.subr.bf16.mxu0 0
      %2015 = vmatpush1.bf16.msra.mxu0 0
      %2016 = vmatprep.subr.bf16.mxu0 0
      %2017 = vmatpush1.bf16.msra.mxu0 %v1991
      %2018 = vmatprep.subr.bf16.mxu0 0
      %2019 = vmatpush1.bf16.msra.mxu0 %v1990
      %2020 = vmatprep.subr.bf16.mxu0 0
      %2021 = vmatpush1.bf16.msra.mxu0 %v1989
      %2022 = vmatprep.subr.bf16.mxu0 0
      %2023 = vmatpush1.bf16.msra.mxu0 %v1988
      %2024 = vmatprep.subr.bf16.mxu0 0
      %2025 = vmatpush2.bf16.msra.mxu0 0
      %2026 = vmatprep.subr.bf16.mxu0 0
      %2027 = vmatpush2.bf16.msra.mxu0 0
      %2028 = vmatprep.subr.bf16.mxu0 0
      %2029 = vmatpush2.bf16.msra.mxu0 0
      %2030 = vmatprep.subr.bf16.mxu0 0
      %2031 = vmatpush2.bf16.msra.mxu0 0
      %2032 = vmatprep.subr.bf16.mxu0 0
      %2033 = vmatpush2.bf16.msra.mxu0 0
      %2034 = vmatprep.subr.bf16.mxu0 0
      %2035 = vmatpush2.bf16.msra.mxu0 0
      %2036 = vmatprep.subr.bf16.mxu0 0
      %2037 = vmatpush2.bf16.msra.mxu0 0
      %2038 = vmatprep.subr.bf16.mxu0 0
      %2039 = vmatpush2.bf16.msra.mxu0 0
      %2040 = vmatprep.mubr.bf16.mxu0 0
      %2041 = vmatmul.mubr.bf16.gmra.mxu0 %v1997
      %v2042 = vpop.f32.mrf.mxu0
      %v2043 = vadd.f32 0.0, %v2042
      %v2044 = vpop.f32.mrf.mxu0
      %v2045 = vpop.f32.mrf.mxu0
      %v2046 = vadd.f32 0.0, %v2045
      %v2047 = vpop.f32.mrf.mxu0
      %2048 = vmatprep.mubr.bf16.mxu0 0
      %2049 = vmatmul.mubr.bf16.gmra.mxu0 %v2000
      %v2050 = vpop.f32.mrf.mxu0
      %v2051 = vadd.f32 0.0, %v2050
      %v2052 = vpop.f32.mrf.mxu0
      %v2053 = vpop.f32.mrf.mxu0
      %v2054 = vadd.f32 0.0, %v2053
      %v2055 = vpop.f32.mrf.mxu0
      %2056 = vmatprep.mubr.bf16.mxu0 0
      %2057 = vmatmul.mubr.bf16.gmra.mxu0 %v2003
      %v2058 = vpop.f32.mrf.mxu0
      %v2059 = vadd.f32 0.0, %v2058
      %v2060 = vpop.f32.mrf.mxu0
      %v2061 = vpop.f32.mrf.mxu0
      %v2062 = vadd.f32 0.0, %v2061
      %v2063 = vpop.f32.mrf.mxu0
      %2064 = vmatprep.mubr.bf16.mxu0 0
      %2065 = vmatmul.mubr.bf16.gmra.mxu0 %v2006
      %v2066 = vpop.f32.mrf.mxu0
      %v2067 = vadd.f32 0.0, %v2066
      %v2068 = vpop.f32.mrf.mxu0
      %v2069 = vpop.f32.mrf.mxu0
      %v2070 = vadd.f32 0.0, %v2069
      %v2071 = vpop.f32.mrf.mxu0
      %2072 = vdwg.mxu0
      %v2073 = vrcp.pop %v1527
      %v2074 = vrcp.pop %v1530
      %v2075 = vrcp.pop %v1533
      %v2076 = vrcp.pop %v1536
      %v2077 = vrcp.pop %v1539
      %v2078 = vrcp.pop %v1542
      %v2079 = vrcp.pop %v1545
      %v2080 = vrcp.pop %v1548
      %v2081 = vrcp.pop %v1551
      %v2082 = vrcp.pop %v1554
      %v2083 = vrcp.pop %v1557
      %v2084 = vrcp.pop %v1560
      %v2085 = vrcp.pop %v1563
      %v2086 = vrcp.pop %v1566
      %v2087 = vrcp.pop %v1569
      %v2088 = vrcp.pop %v1572
      %v2089 = vrcp.pop %v1575
      %v2090 = vrcp.pop %v1578
      %v2091 = vrcp.pop %v1581
      %v2092 = vrcp.pop %v1584
      %v2093 = vrcp.pop %v1587
      %v2094 = vrcp.pop %v1590
      %v2095 = vrcp.pop %v1593
      %v2096 = vrcp.pop %v1596
      %v2097 = vrcp.pop %v1599
      %v2098 = vrcp.pop %v1602
      %v2099 = vrcp.pop %v1605
      %v2100 = vrcp.pop %v1608
      %v2101 = vrcp.pop %v1611
      %v2102 = vrcp.pop %v1614
      %v2103 = vrcp.pop %v1617
      %v2104 = vrcp.pop %v1620
      %v2105 = vmul.f32 %v1740, %v2073
      %v2106 = vmul.f32 %v1743, %v2074
      %v2107 = vmul.f32 %v1748, %v2075
      %v2108 = vmul.f32 %v1751, %v2076
      %v2109 = vmul.f32 %v1756, %v2077
      %v2110 = vmul.f32 %v1759, %v2078
      %v2111 = vmul.f32 %v1764, %v2079
      %v2112 = vmul.f32 %v1767, %v2080
      %v2113 = vmul.f32 %v1841, %v2081
      %v2114 = vmul.f32 %v1844, %v2082
      %v2115 = vmul.f32 %v1849, %v2083
      %v2116 = vmul.f32 %v1852, %v2084
      %v2117 = vmul.f32 %v1857, %v2085
      %v2118 = vmul.f32 %v1860, %v2086
      %v2119 = vmul.f32 %v1865, %v2087
      %v2120 = vmul.f32 %v1868, %v2088
      %v2121 = vmul.f32 %v1942, %v2089
      %v2122 = vmul.f32 %v1945, %v2090
      %v2123 = vmul.f32 %v1950, %v2091
      %v2124 = vmul.f32 %v1953, %v2092
      %v2125 = vmul.f32 %v1958, %v2093
      %v2126 = vmul.f32 %v1961, %v2094
      %v2127 = vmul.f32 %v1966, %v2095
      %v2128 = vmul.f32 %v1969, %v2096
      %v2129 = vmul.f32 %v2043, %v2097
      %v2130 = vmul.f32 %v2046, %v2098
      %v2131 = vmul.f32 %v2051, %v2099
      %v2132 = vmul.f32 %v2054, %v2100
      %v2133 = vmul.f32 %v2059, %v2101
      %v2134 = vmul.f32 %v2062, %v2102
      %v2135 = vmul.f32 %v2067, %v2103
      %v2136 = vmul.f32 %v2070, %v2104
      %2145 = vrot.lane.b32.xlu0 %v2113, 8
      %v2146 = vpop.permute.xlu0 %2145
      %2147 = vrot.lane.b32.xlu0 %v2114, 8
      %v2148 = vpop.permute.xlu0 %2147
      %2149 = vrot.lane.b32.xlu0 %v2115, 8
      %v2150 = vpop.permute.xlu0 %2149
      %2151 = vrot.lane.b32.xlu0 %v2116, 8
      %v2152 = vpop.permute.xlu0 %2151
      %2153 = vrot.lane.b32.xlu0 %v2117, 8
      %v2154 = vpop.permute.xlu0 %2153
      %2155 = vrot.lane.b32.xlu0 %v2118, 8
      %v2156 = vpop.permute.xlu0 %2155
      %2157 = vrot.lane.b32.xlu0 %v2119, 8
      %v2158 = vpop.permute.xlu0 %2157
      %2159 = vrot.lane.b32.xlu0 %v2120, 8
      %v2160 = vpop.permute.xlu0 %2159
      %2177 = vrot.lane.b32.xlu0 %v2121, 16
      %v2178 = vpop.permute.xlu0 %2177
      %2179 = vrot.lane.b32.xlu0 %v2122, 16
      %v2180 = vpop.permute.xlu0 %2179
      %2181 = vrot.lane.b32.xlu0 %v2123, 16
      %v2182 = vpop.permute.xlu0 %2181
      %2183 = vrot.lane.b32.xlu0 %v2124, 16
      %v2184 = vpop.permute.xlu0 %2183
      %2185 = vrot.lane.b32.xlu0 %v2125, 16
      %v2186 = vpop.permute.xlu0 %2185
      %2187 = vrot.lane.b32.xlu0 %v2126, 16
      %v2188 = vpop.permute.xlu0 %2187
      %2189 = vrot.lane.b32.xlu0 %v2127, 16
      %v2190 = vpop.permute.xlu0 %2189
      %2191 = vrot.lane.b32.xlu0 %v2128, 16
      %v2192 = vpop.permute.xlu0 %2191
      %2209 = vrot.lane.b32.xlu0 %v2129, 24
      %v2210 = vpop.permute.xlu0 %2209
      %2211 = vrot.lane.b32.xlu0 %v2130, 24
      %v2212 = vpop.permute.xlu0 %2211
      %2213 = vrot.lane.b32.xlu0 %v2131, 24
      %v2214 = vpop.permute.xlu0 %2213
      %2215 = vrot.lane.b32.xlu0 %v2132, 24
      %v2216 = vpop.permute.xlu0 %2215
      %2217 = vrot.lane.b32.xlu0 %v2133, 24
      %v2218 = vpop.permute.xlu0 %2217
      %2219 = vrot.lane.b32.xlu0 %v2134, 24
      %v2220 = vpop.permute.xlu0 %2219
      %2221 = vrot.lane.b32.xlu0 %v2135, 24
      %v2222 = vpop.permute.xlu0 %2221
      %2223 = vrot.lane.b32.xlu0 %v2136, 24
      %v2224 = vpop.permute.xlu0 %2223
      %v2233 = vsel %vm915, %v2105, %v2146
      %v2234 = vsel %vm915, %v2106, %v2148
      %v2235 = vsel %vm915, %v2107, %v2150
      %v2236 = vsel %vm915, %v2108, %v2152
      %v2237 = vsel %vm915, %v2109, %v2154
      %v2238 = vsel %vm915, %v2110, %v2156
      %v2239 = vsel %vm915, %v2111, %v2158
      %v2240 = vsel %vm915, %v2112, %v2160
      %vm2241 = vcmask 130048
      %v2242 = vsel %vm2241, %v2233, %v2178
      %v2243 = vsel %vm2241, %v2234, %v2180
      %v2244 = vsel %vm2241, %v2235, %v2182
      %v2245 = vsel %vm2241, %v2236, %v2184
      %v2246 = vsel %vm2241, %v2237, %v2186
      %v2247 = vsel %vm2241, %v2238, %v2188
      %v2248 = vsel %vm2241, %v2239, %v2190
      %v2249 = vsel %vm2241, %v2240, %v2192
      %vm2250 = vcmask 195584
      %v2251 = vsel %vm2250, %v2242, %v2210
      %v2252 = vsel %vm2250, %v2243, %v2212
      %v2253 = vsel %vm2250, %v2244, %v2214
      %v2254 = vsel %vm2250, %v2245, %v2216
      %v2255 = vsel %vm2250, %v2246, %v2218
      %v2256 = vsel %vm2250, %v2247, %v2220
      %v2257 = vsel %vm2250, %v2248, %v2222
      %v2258 = vsel %vm2250, %v2249, %v2224
      %v2259 = vpack.c.bf16 %v2252, %v2251
      %v2260 = vpack.c.bf16 %v2254, %v2253
      %v2261 = vpack.c.bf16 %v2256, %v2255
      %v2262 = vpack.c.bf16 %v2258, %v2257
      %v2263 = vld [vmem:[%s4] sm:$0xf]
      %v2264 = vld [vmem:[%s4 + $0x4] sm:$0xf]
      %v2265 = vld [vmem:[%s4 + $0x8] sm:$0xf]
      %v2266 = vld [vmem:[%s4 + $0xc] sm:$0xf]
      %v2267 = vld [vmem:[%s5] sm:$0x1]
      %v2269 = vlaneseq
      %v2270 = vshrl.u32 %v2269, 7
      %v2271 = vsub.s32 0, %v2270
      %v2272 = vrot.slane %v2267, %v2271
      %v2278 = vunpack.c.l.b16 %v2263
      %v2279 = vunpack.c.l.b16 %v2264
      %v2280 = vunpack.c.l.b16 %v2265
      %v2281 = vunpack.c.l.b16 %v2266
      %v2282 = vpack.c.b16 %v2279, %v2278
      %v2283 = vpack.c.b16 %v2281, %v2280
      %v2287 = vsel %vm753, %v2259, 0
      %v2290 = vsel %vm753, %v2260, 0
      %v2293 = vsel %vm753, %v2261, 0
      %v2296 = vsel %vm753, %v2262, 0
      %2298 = vmatprep.subr.bf16.mxu0 0
      %2299 = vmatpush1.bf16.msra.mxu0 0
      %2300 = vmatprep.subr.bf16.mxu0 0
      %2301 = vmatpush1.bf16.msra.mxu0 0
      %2302 = vmatprep.subr.bf16.mxu0 0
      %2303 = vmatpush1.bf16.msra.mxu0 0
      %2304 = vmatprep.subr.bf16.mxu0 0
      %2305 = vmatpush1.bf16.msra.mxu0 0
      %2306 = vmatprep.subr.bf16.mxu0 0
      %2307 = vmatpush1.bf16.msra.mxu0 0
      %2308 = vmatprep.subr.bf16.mxu0 0
      %2309 = vmatpush1.bf16.msra.mxu0 0
      %2310 = vmatprep.subr.bf16.mxu0 0
      %2311 = vmatpush1.bf16.msra.mxu0 %v2283
      %2312 = vmatprep.subr.bf16.mxu0 0
      %2313 = vmatpush1.bf16.msra.mxu0 %v2282
      %2314 = vmatprep.subr.bf16.mxu0 0
      %2315 = vmatpush2.bf16.msra.mxu0 0
      %2316 = vmatprep.subr.bf16.mxu0 0
      %2317 = vmatpush2.bf16.msra.mxu0 0
      %2318 = vmatprep.subr.bf16.mxu0 0
      %2319 = vmatpush2.bf16.msra.mxu0 0
      %2320 = vmatprep.subr.bf16.mxu0 0
      %2321 = vmatpush2.bf16.msra.mxu0 0
      %2322 = vmatprep.subr.bf16.mxu0 0
      %2323 = vmatpush2.bf16.msra.mxu0 0
      %2324 = vmatprep.subr.bf16.mxu0 0
      %2325 = vmatpush2.bf16.msra.mxu0 0
      %2326 = vmatprep.subr.bf16.mxu0 0
      %2327 = vmatpush2.bf16.msra.mxu0 0
      %2328 = vmatprep.subr.bf16.mxu0 0
      %2329 = vmatpush2.bf16.msra.mxu0 0
      %2330 = vmatprep.mubr.bf16.mxu0 0
      %2331 = vmatmul.mubr.bf16.gmra.mxu0 %v2287
      %v2332 = vpop.f32.mrf.mxu0
      %v2333 = vadd.f32 %v2272, %v2332
      %v2334 = vpop.f32.mrf.mxu0
      %v2335 = vpop.f32.mrf.mxu0
      %v2336 = vadd.f32 %v2272, %v2335
      %v2337 = vpop.f32.mrf.mxu0
      %2338 = vmatprep.mubr.bf16.mxu0 0
      %2339 = vmatmul.mubr.bf16.gmra.mxu0 %v2290
      %v2340 = vpop.f32.mrf.mxu0
      %v2341 = vadd.f32 %v2272, %v2340
      %v2342 = vpop.f32.mrf.mxu0
      %v2343 = vpop.f32.mrf.mxu0
      %v2344 = vadd.f32 %v2272, %v2343
      %v2345 = vpop.f32.mrf.mxu0
      %2346 = vmatprep.mubr.bf16.mxu0 0
      %2347 = vmatmul.mubr.bf16.gmra.mxu0 %v2293
      %v2348 = vpop.f32.mrf.mxu0
      %v2349 = vadd.f32 %v2272, %v2348
      %v2350 = vpop.f32.mrf.mxu0
      %v2351 = vpop.f32.mrf.mxu0
      %v2352 = vadd.f32 %v2272, %v2351
      %v2353 = vpop.f32.mrf.mxu0
      %2354 = vmatprep.mubr.bf16.mxu0 0
      %2355 = vmatmul.mubr.bf16.gmra.mxu0 %v2296
      %v2356 = vpop.f32.mrf.mxu0
      %v2357 = vadd.f32 %v2272, %v2356
      %v2358 = vpop.f32.mrf.mxu0
      %v2359 = vpop.f32.mrf.mxu0
      %v2360 = vadd.f32 %v2272, %v2359
      %v2361 = vpop.f32.mrf.mxu0
      %2362 = vdwg.mxu0
      %v2363 = vpack.c.bf16 %v2336, %v2333
      %v2364 = vpack.c.bf16 %v2344, %v2341
      %v2365 = vpack.c.bf16 %v2352, %v2349
      %v2366 = vpack.c.bf16 %v2360, %v2357
      %v2371 = vunpack.c.l.b16 %v2363
      %v2372 = vunpack.c.h.b16 %v2363
      %v2373 = vunpack.c.l.b16 %v2364
      %v2374 = vunpack.c.h.b16 %v2364
      %v2375 = vunpack.c.l.b16 %v2365
      %v2376 = vunpack.c.h.b16 %v2365
      %v2377 = vunpack.c.l.b16 %v2366
      %v2378 = vunpack.c.h.b16 %v2366
      %v2379 = vpack.c.b16 %v2371, %v2371
      %v2380 = vpack.c.b16 %v2372, %v2372
      %v2381 = vpack.c.b16 %v2373, %v2373
      %v2382 = vpack.c.b16 %v2374, %v2374
      %v2383 = vpack.c.b16 %v2375, %v2375
      %v2384 = vpack.c.b16 %v2376, %v2376
      %v2385 = vpack.c.b16 %v2377, %v2377
      %v2386 = vpack.c.b16 %v2378, %v2378
      %vm2395 = vcmask 257024
      %2396 = vst.msk [vmem:[%s309] sm:$0xf] %vm2395, %v2379
      %2397 = vst.msk [vmem:[%s309 + $0x4] sm:$0xf] %vm2395, %v2380
      %2398 = vst.msk [vmem:[%s309 + $0x8] sm:$0xf] %vm2395, %v2381
      %2399 = vst.msk [vmem:[%s309 + $0xc] sm:$0xf] %vm2395, %v2382
      %2400 = vst.msk [vmem:[%s309 + $0x10] sm:$0xf] %vm2395, %v2383
      %2401 = vst.msk [vmem:[%s309 + $0x14] sm:$0xf] %vm2395, %v2384
      %2402 = vst.msk [vmem:[%s309 + $0x18] sm:$0xf] %vm2395, %v2385
      %2403 = vst.msk [vmem:[%s309 + $0x1c] sm:$0xf] %vm2395, %v2386
      %s2404 = smul.u32 8, %s22
      %p2405 = scmp.lt.s32.totalorder %s21, 1
      %s2406 = scalar_select %p2405, %s21, 1
      %p2407 = scmp.lt.s32.totalorder %s2404, 7
      %s2408 = scalar_select %p2407, %s2404, 7
      %s2409 = smul.addr %s2406, 8
      %s2410 = sadd.s32 %s2408, %s2409
      %s2411 = smul.addr %s2410, 4
      %s2412 = scalar_lea.vmem %s6, %s2411
      // Predicated region
      $region49: #{tpu_custom_call.1} parent=43 // pred_check
        %p2413 = pneg %p187
      $region50: #{tpu_custom_call.1} parent=43 // pred_check_branch
        %2415 = sbr.rel (%p2413) target = $region52
      $region51: #{tpu_custom_call.1} parent=43 // pred_region
        %s2416 = smul.u32 8, %s22
      $region52: #{tpu_custom_call.1} parent=43 // pred_fallthru
        _
    $region44: #{tpu_custom_call.1} parent=5 // pred_fallthru
      _
    %p2417 = scmp.le.s32.totalorder 2, %s12
    // Predicated region
    $region53: #{tpu_custom_call.1} parent=5 // pred_check
      %p2418 = pneg %p2417
    $region54: #{tpu_custom_call.1} parent=5 // pred_check_branch
      %2420 = sbr.rel (%p2418) target = $region56
    $region55: #{tpu_custom_call.1} parent=5 // pred_region
      %s2421 = ssub.s32 %s12, 2
      // Predicated region
      $region57: #{tpu_custom_call.1} parent=55 // pred_check
        %p2422 = pneg %p193
      $region58: #{tpu_custom_call.1} parent=55 // pred_check_branch
        %2424 = sbr.rel (%p2422) target = $region60
      $region59: #{tpu_custom_call.1} parent=55 // pred_region
        %s2425 = smul.u32 8, %s24
        %p2426 = scmp.lt.s32.totalorder %s23, 1
        %s2427 = scalar_select %p2426, %s23, 1
        %p2428 = scmp.lt.s32.totalorder %s2425, 7
        %s2429 = scalar_select %p2428, %s2425, 7
        %s2430 = smul.addr %s2427, 8
        %s2431 = sadd.s32 %s2429, %s2430
        %s2432 = smul.addr %s2431, 4
        %s2433 = scalar_lea.vmem %s6, %s2432
      $region60: #{tpu_custom_call.1} parent=55 // pred_fallthru
        _
    $region56: #{tpu_custom_call.1} parent=5 // pred_fallthru
      _
  $region6: #{tpu_custom_call.1} parent=0 // loop_footer
    %s16 = sadd.s32 1, %s12
  $region7: #{tpu_custom_call.1} parent=0 // loop_footer_branch
    %11 = sbr.rel target = $region3
  $region8: #{tpu_custom_call.1} parent=0 // loop_exit
    _

</llo_original>
